<compile_context>
chip_gen: v7x
topology: tpu7x:2x2x1
jax: 0.10.0
libtpu: 0.0.40
codegen_flags: <defaults>
</compile_context>

<pallas_src>
import jax
import jax.numpy as jnp
from jax.experimental import pallas as pl
from jax.experimental.pallas import tpu as pltpu

EPS = 1e-8
BF16 = jnp.bfloat16


def _rms(t, w):
    # RMSNorm (eps=1e-8, matching the reference) -- kept in f32.
    ms = jnp.mean(t * t, axis=-1, keepdims=True)
    return t * jax.lax.rsqrt(ms + EPS) * w


def _act(t):
    # TODO(synk): PyTorch nn.GELU defaults to the exact erf form; tanh approximation
    # is used here (small numerical difference only).
    return jax.nn.gelu(t, approximate=True)


def _mm(a, b):
    # MXU matmul: bf16 operands, f32 accumulation.
    return jnp.dot(a, b, preferred_element_type=jnp.float32)


def waveseeker_kernel(
    x_ref,        # (M, E)   f32 activations (Bt samples stacked along rows)
    wfg_ref,      # (E, 2E)  fused [wfft | wg] pre-linear weights, bf16
    fnr_ref,      # (M, M)   block-diag Re(DFT over patches), bf16
    fni_ref,      # (M, M)   block-diag Im(DFT over patches), bf16
    fe_ref,       # (2E, E)  stacked DFT over embed [Fer ; -Fei], bf16
    wiuv_ref,     # (E, 2E)  fused gMLP proj-in [wiu | wiv], bf16
    sw_ref,       # (M, M)   block-diag spatial-gating weight, bf16
    wo_ref,       # (E, E)   gMLP proj-out weight, bf16
    wstar_ref,    # (2E, 2E) Star layer weight [W1 | W2], bf16
    we1_ref,      # (E, 2E)  WaveExpert FFN layer-1 weight, bf16
    we2_ref,      # (2E, E)  WaveExpert FFN layer-2 weight, bf16
    vece_ref,     # (16, E)  packed E-wide biases / norm weights, f32
    vec2e_ref,    # (2, 2E)  packed 2E-wide biases, f32
    sb_ref,       # (M, 1)   tiled spatial-gating bias, f32
    out_ref,      # (M, E)
):
    E = out_ref.shape[-1]

    x = x_ref[...]                                     # (M, E) f32

    # Packed bias / norm-weight rows (each used exactly once; broadcast happens
    # at the single use site).
    # TODO(synk): could become sublane-broadcast strided loads (pl.ds(..., stride=0))
    # to move the broadcast into the vector-load slot.
    n1w, fftb, gb, gnw = (vece_ref[0:1, :], vece_ref[1:2, :],
                          vece_ref[2:3, :], vece_ref[3:4, :])
    biu, biv, sgnw, bo = (vece_ref[4:5, :], vece_ref[5:6, :],
                          vece_ref[6:7, :], vece_ref[7:8, :])
    n2w, be2 = vece_ref[8:9, :], vece_ref[9:10, :]
    star_b, be1 = vec2e_ref[0:1, :], vec2e_ref[1:2, :]

    # ---- norm_1 -------------------------------------------------------------
    xn = _rms(x, n1w)

    # ---- fused pre-linears for both heads: one (M,E)@(E,2E) matmul -----------
    hg = _mm(xn.astype(BF16), wfg_ref[...])            # (M, 2E)
    h = hg[:, :E] + fftb                               # FFT-head pre-linear
    g = hg[:, E:] + gb                                 # gMLP-head pre-linear

    # ---- FFT head: act(Re(FFT2)) ---------------------------------------------
    # Patch-dim DFT via two block-diagonal (M,M) matmuls, one lane-aligned concat,
    # then the embed-dim DFT as a single stacked (2E,E) matmul.
    h16 = h.astype(BF16)
    re_n = _mm(fnr_ref[...], h16)                      # (M, E)  Re(F_N @ h)
    im_n = _mm(fni_ref[...], h16)                      # (M, E)  Im(F_N @ h)
    m_cat = jnp.concatenate([re_n, im_n], axis=-1)     # (M, 2E), lane-aligned
    # TODO(synk): keep this stage f32 if exact parity with torch.fft.fft2 matters.
    fft_out = _act(_mm(m_cat.astype(BF16), fe_ref[...]))          # (M, E)

    # ---- gMLP head ------------------------------------------------------------
    gn = _rms(g, gnw)
    uv = _mm(gn.astype(BF16), wiuv_ref[...])           # (M, 2E) fused proj-in
    u = _act(uv[:, :E] + biu)
    vv = _act(uv[:, E:] + biv)
    vn = _rms(vv, sgnw)
    v2 = _mm(sw_ref[...], vn.astype(BF16)) + sb_ref[...]   # block-diag spatial gating
    gmlp_out = _mm((u * v2).astype(BF16), wo_ref[...]) + bo + g

    # ---- Star layer on concat([fft, gmlp]) as ONE (M,2E)@(2E,2E) matmul -------
    cat = jnp.concatenate([fft_out, gmlp_out], axis=-1)          # (M, 2E)
    s = _mm(cat.astype(BF16), wstar_ref[...]) + star_b           # (M, 2E) = [s1 | s2]
    xs = _act(s[:, :E]) * s[:, E:] + x                           # star + input residual

    # ---- norm_2 + WaveExpert FFN; residual is the post-norm tensor ------------
    xs_n = _rms(xs, n2w)
    hid = _act(_mm(xs_n.astype(BF16), we1_ref[...]) + be1)       # (M, 2E)
    e = _mm(hid.astype(BF16), we2_ref[...]) + be2                # (M, E)
    out_ref[...] = (e + xs_n).astype(out_ref.dtype)              # Dropout1d = identity (eval)


# ------------------------------ wrapper ---------------------------------------

def _dft(n):
    idx = jnp.arange(n, dtype=jnp.float32)
    ang = -2.0 * jnp.pi * idx[:, None] * idx[None, :] / n
    return jnp.cos(ang), jnp.sin(ang)


def _pick_block_batch(B, N):
    # Target >= 256 rows per grid step (fills the 256-wide MXUs on v6e/v7x;
    # 128 already saturates v5e). If the whole batch is smaller than that, do
    # it in one step: the 1-D grid is a serial loop on v5e/v6e, so extra tiny
    # steps only add per-step overhead and halve MXU row fill.
    target_rows = 256
    if B * N <= target_rows:
        return B
    bt = -(-target_rows // N)
    while B % bt:                     # evenly divisible grid
        bt += 1
    return bt


def _prepare_params(p, N, E, Bt):
    """Pack logical per-module parameters into the fused kernel operand list."""
    eye = jnp.eye(Bt, dtype=jnp.float32)

    def block_diag(m):                # (N,N) -> (Bt*N, Bt*N) block-diagonal, bf16
        return jnp.kron(eye, m).astype(BF16)

    # Fused pre-linears and proj-in / star weights (split at lane-128 boundaries
    # inside the kernel).
    wfg = jnp.concatenate([p["wfft"], p["wg"]], axis=1).astype(BF16)     # (E, 2E)
    wiuv = jnp.concatenate([p["wiu"], p["wiv"]], axis=1).astype(BF16)    # (E, 2E)
    wstar = jnp.concatenate([p["w1"], p["w2"]], axis=1).astype(BF16)     # (2E, 2E)

    # DFT matrices: Re(FFT2) = (Fnr@X) @ Fer - (Fni@X) @ Fei
    #             = concat([Fnr@X, Fni@X], -1) @ [Fer ; -Fei].
    fnr, fni = _dft(N)
    fer, fei = _dft(E)
    fe_stack = jnp.concatenate([fer, -fei], axis=0).astype(BF16)          # (2E, E)

    # Packed E-wide vectors:
    #  0: norm_1 w   1: fft bias       2: gmlp pre-lin bias  3: gmlp-block norm w
    #  4: proj-in bias (u)  5: proj-in bias (v)  6: SGU norm w  7: proj-out bias
    #  8: norm_2 w   9: expert layer-2 bias      10..15: padding
    vece = jnp.concatenate(
        [jnp.stack([p["n1w"], p["bfft"], p["bg"], p["gnw"],
                    p["biu"], p["biv"], p["sgnw"], p["bo"],
                    p["n2w"], p["be2"]]),
         jnp.zeros((6, E), jnp.float32)], axis=0)                          # (16, E)
    # Packed 2E-wide vectors: 0: star bias [b1|b2], 1: expert layer-1 bias.
    vec2e = jnp.stack([jnp.concatenate([p["b1"], p["b2"]]), p["be1"]])     # (2, 2E)

    sb_tiled = jnp.tile(p["sb"].reshape(N, 1), (Bt, 1))                    # (M, 1)

    return [
        wfg,
        block_diag(fnr), block_diag(fni), fe_stack,
        wiuv,
        block_diag(p["sw"]),
        p["wo"].astype(BF16),
        wstar,
        p["we1"].astype(BF16), p["we2"].astype(BF16),
        vece, vec2e, sb_tiled,
    ]


def waveseeker_forward(x, params, block_batch=None):
    """Fused WaveSeekerBlock forward. x: (B, N, E) float32. Returns (out, z_loss)."""
    B, N, E = x.shape
    # TODO(synk): for model dims that are not multiples of 128, pad E (and every
    # E-sized weight) to the next multiple of 128 here; the demo uses E=128.
    assert E % 128 == 0, "pad embedding_dim to a multiple of 128 for lane-dense tiles"
    Bt = _pick_block_batch(B, N) if block_batch is None else block_batch
    assert B % Bt == 0, "batch must be divisible by block_batch"
    M = Bt * N

    packed = _prepare_params(params, N, E, Bt)
    x2 = x.reshape(B * N, E)          # fold batch into the matmul M dimension

    act_spec = pl.BlockSpec((M, E), lambda i: (i, 0))
    # Weights / packed vectors: full-array blocks with grid-invariant index maps.
    # TODO(synk): on v7x (64 MiB VMEM) at large E, single-buffer these
    # (pipeline_mode=pl.Buffered(1)) or stage them manually once before the grid loop.
    weight_specs = [pl.BlockSpec(p.shape, lambda i: (0, 0)) for p in packed]

    # Explicit VMEM byte budget: double-buffered activation in/out blocks +
    # (currently double-buffered) grid-invariant weights + headroom for f32
    # temporaries ((M,2E) intermediates, spills).
    io_bytes = 2 * 2 * (M * E * 4)
    w_bytes = 2 * sum(int(p.size) * p.dtype.itemsize for p in packed)
    vmem_limit = min(io_bytes + w_bytes + (16 << 20), 100 << 20)

    out2 = pl.pallas_call(
        waveseeker_kernel,
        out_shape=jax.ShapeDtypeStruct((B * N, E), jnp.float32),
        grid_spec=pltpu.PrefetchScalarGridSpec(
            num_scalar_prefetch=0,
            grid=(B // Bt,),
            in_specs=[act_spec] + weight_specs,
            out_specs=pl.BlockSpec((M, E), lambda i: (i, 0)),
        ),
        compiler_params=pltpu.CompilerParams(
            dimension_semantics=("parallel",),
            vmem_limit_bytes=int(vmem_limit),
        ),
    )(x2, *packed)

    z_loss = 0.0   # use_smoe=False branch of the reference forward
    return out2.reshape(B, N, E), z_loss


def make_params(key, N, E):
    ks = jax.random.split(key, 10)

    def w(k, i, o, scale=0.05):
        return jax.random.normal(k, (i, o), jnp.float32) * scale

    ones_e = jnp.ones((E,), jnp.float32)
    zeros_e = jnp.zeros((E,), jnp.float32)
    return dict(
        n1w=ones_e,                                     # RMSNorm-1 weight
        wfft=w(ks[0], E, E), bfft=zeros_e,              # FFT-head pre-linear
        wg=w(ks[1], E, E), bg=zeros_e,                  # gMLP-head pre-linear
        gnw=ones_e,                                     # gMLP block norm weight
        wiu=w(ks[2], E, E), biu=zeros_e,                # gMLP proj-in (u half)
        wiv=w(ks[3], E, E), biv=zeros_e,                # gMLP proj-in (v half)
        sgnw=ones_e,                                    # spatial-gating-unit norm weight
        sw=w(ks[4], N, N), sb=jnp.ones((N,), jnp.float32),   # spatial gating (bias init=1)
        wo=w(ks[5], E, E), bo=zeros_e,                  # gMLP proj-out
        w1=w(ks[6], 2 * E, E), b1=zeros_e,              # Star layer branch 1
        w2=w(ks[7], 2 * E, E), b2=zeros_e,              # Star layer branch 2
        n2w=ones_e,                                     # RMSNorm-2 weight
        we1=w(ks[8], E, 2 * E), be1=jnp.zeros((2 * E,), jnp.float32),   # WaveExpert FFN-1
        we2=w(ks[9], 2 * E, E), be2=zeros_e,            # WaveExpert FFN-2
    )

# TODO(synk): WaveNETHead (use_wavelet=True) needs pywt wavelet filter banks not defined
# in the reference; the wavelet branch is disabled (use_wavelet=False).
# TODO(synk): SparseMoE top-k routing (use_smoe=True) is not defined in the reference;
# the use_smoe=False / WaveExpert branch is implemented instead (z_loss == 0.0).
# TODO(synk): Dropout / Dropout1d are identity here (inference-mode forward).


if __name__ == "__main__":
    B, N, E = 8, 8, 128                # batch, n_patches, embedding_dim (E lane-aligned)
    key = jax.random.PRNGKey(0)
    kx, kp = jax.random.split(key)
    x = jax.random.normal(kx, (B, N, E), jnp.float32)
    params = make_params(kp, N, E)

    out, z_loss = waveseeker_forward(x, params)       # block_batch auto-picked per M>=256 rule
    out = jax.block_until_ready(out)
    assert out.shape == (B, N, E) and bool(jnp.all(jnp.isfinite(out)))
    print("KERNEL_OK")
</pallas_src>

<mosaic_0001>
module attributes {stable_mosaic.version = 11 : i64} {
  func.func @waveseeker_kernel(%arg0: i32, %arg1: memref<64x128xf32, #tpu.memory_space<vmem>>, %arg2: memref<128x256xbf16, #tpu.memory_space<vmem>>, %arg3: memref<64x64xbf16, #tpu.memory_space<vmem>>, %arg4: memref<64x64xbf16, #tpu.memory_space<vmem>>, %arg5: memref<256x128xbf16, #tpu.memory_space<vmem>>, %arg6: memref<128x256xbf16, #tpu.memory_space<vmem>>, %arg7: memref<64x64xbf16, #tpu.memory_space<vmem>>, %arg8: memref<128x128xbf16, #tpu.memory_space<vmem>>, %arg9: memref<256x256xbf16, #tpu.memory_space<vmem>>, %arg10: memref<128x256xbf16, #tpu.memory_space<vmem>>, %arg11: memref<256x128xbf16, #tpu.memory_space<vmem>>, %arg12: memref<16x128xf32, #tpu.memory_space<vmem>>, %arg13: memref<2x256xf32, #tpu.memory_space<vmem>>, %arg14: memref<64x1xf32, #tpu.memory_space<vmem>>, %arg15: memref<64x128xf32, #tpu.memory_space<vmem>>) attributes {dimension_semantics = [#tpu.dimension_semantics<parallel>], iteration_bounds = array<i64: 1>, scalar_prefetch = 0 : i64, scratch_operands = 0 : i64, tpu.core_type = #tpu.core_type<tc>, window_params = [{transform_indices = @transform_0, window_bounds = array<i64: 64, 128>}, {pipeline_mode = #tpu.pipeline_mode<synchronous>, transform_indices = @transform_1, window_bounds = array<i64: 128, 256>}, {pipeline_mode = #tpu.pipeline_mode<synchronous>, transform_indices = @transform_2, window_bounds = array<i64: 64, 64>}, {pipeline_mode = #tpu.pipeline_mode<synchronous>, transform_indices = @transform_3, window_bounds = array<i64: 64, 64>}, {pipeline_mode = #tpu.pipeline_mode<synchronous>, transform_indices = @transform_4, window_bounds = array<i64: 256, 128>}, {pipeline_mode = #tpu.pipeline_mode<synchronous>, transform_indices = @transform_5, window_bounds = array<i64: 128, 256>}, {pipeline_mode = #tpu.pipeline_mode<synchronous>, transform_indices = @transform_6, window_bounds = array<i64: 64, 64>}, {pipeline_mode = #tpu.pipeline_mode<synchronous>, transform_indices = @transform_7, window_bounds = array<i64: 128, 128>}, {pipeline_mode = #tpu.pipeline_mode<synchronous>, transform_indices = @transform_8, window_bounds = array<i64: 256, 256>}, {pipeline_mode = #tpu.pipeline_mode<synchronous>, transform_indices = @transform_9, window_bounds = array<i64: 128, 256>}, {pipeline_mode = #tpu.pipeline_mode<synchronous>, transform_indices = @transform_10, window_bounds = array<i64: 256, 128>}, {pipeline_mode = #tpu.pipeline_mode<synchronous>, transform_indices = @transform_11, window_bounds = array<i64: 16, 128>}, {pipeline_mode = #tpu.pipeline_mode<synchronous>, transform_indices = @transform_12, window_bounds = array<i64: 2, 256>}, {pipeline_mode = #tpu.pipeline_mode<synchronous>, transform_indices = @transform_13, window_bounds = array<i64: 64, 1>}, {transform_indices = @transform_14, window_bounds = array<i64: 64, 128>}]} {
    %c0 = arith.constant 0 : index
    %c0_0 = arith.constant 0 : index
    %0 = vector.load %arg1[%c0, %c0_0] : memref<64x128xf32, #tpu.memory_space<vmem>>, vector<64x128xf32>
    %c0_1 = arith.constant 0 : index
    %c0_2 = arith.constant 0 : index
    %1 = vector.load %arg12[%c0_1, %c0_2] : memref<16x128xf32, #tpu.memory_space<vmem>>, vector<1x128xf32>
    %c1 = arith.constant 1 : index
    %c0_3 = arith.constant 0 : index
    %2 = vector.load %arg12[%c1, %c0_3] : memref<16x128xf32, #tpu.memory_space<vmem>>, vector<1x128xf32>
    %c2 = arith.constant 2 : index
    %c0_4 = arith.constant 0 : index
    %3 = vector.load %arg12[%c2, %c0_4] : memref<16x128xf32, #tpu.memory_space<vmem>>, vector<1x128xf32>
    %c3 = arith.constant 3 : index
    %c0_5 = arith.constant 0 : index
    %4 = vector.load %arg12[%c3, %c0_5] : memref<16x128xf32, #tpu.memory_space<vmem>>, vector<1x128xf32>
    %c4 = arith.constant 4 : index
    %c0_6 = arith.constant 0 : index
    %5 = vector.load %arg12[%c4, %c0_6] : memref<16x128xf32, #tpu.memory_space<vmem>>, vector<1x128xf32>
    %c5 = arith.constant 5 : index
    %c0_7 = arith.constant 0 : index
    %6 = vector.load %arg12[%c5, %c0_7] : memref<16x128xf32, #tpu.memory_space<vmem>>, vector<1x128xf32>
    %c6 = arith.constant 6 : index
    %c0_8 = arith.constant 0 : index
    %7 = vector.load %arg12[%c6, %c0_8] : memref<16x128xf32, #tpu.memory_space<vmem>>, vector<1x128xf32>
    %c7 = arith.constant 7 : index
    %c0_9 = arith.constant 0 : index
    %8 = vector.load %arg12[%c7, %c0_9] : memref<16x128xf32, #tpu.memory_space<vmem>>, vector<1x128xf32>
    %c8 = arith.constant 8 : index
    %c0_10 = arith.constant 0 : index
    %9 = vector.load %arg12[%c8, %c0_10] : memref<16x128xf32, #tpu.memory_space<vmem>>, vector<1x128xf32>
    %c9 = arith.constant 9 : index
    %c0_11 = arith.constant 0 : index
    %10 = vector.load %arg12[%c9, %c0_11] : memref<16x128xf32, #tpu.memory_space<vmem>>, vector<1x128xf32>
    %c0_12 = arith.constant 0 : index
    %c0_13 = arith.constant 0 : index
    %11 = vector.load %arg13[%c0_12, %c0_13] : memref<2x256xf32, #tpu.memory_space<vmem>>, vector<1x256xf32>
    %c1_14 = arith.constant 1 : index
    %c0_15 = arith.constant 0 : index
    %12 = vector.load %arg13[%c1_14, %c0_15] : memref<2x256xf32, #tpu.memory_space<vmem>>, vector<1x256xf32>
    %13 = arith.mulf %0, %0 : vector<64x128xf32>
    %cst = arith.constant dense<0.000000e+00> : vector<64xf32>
    %14 = vector.multi_reduction <add>, %13, %cst [1] : vector<64x128xf32> to vector<64xf32>
    %15 = vector.shape_cast %14 : vector<64xf32> to vector<64x1xf32>
    %cst_16 = arith.constant 1.280000e+02 : f32
    %16 = vector.broadcast %cst_16 : f32 to vector<64x1xf32>
    %17 = arith.divf %15, %16 : vector<64x1xf32>
    %cst_17 = arith.constant 9.99999993E-9 : f32
    %18 = vector.broadcast %cst_17 : f32 to vector<64x1xf32>
    %19 = arith.addf %17, %18 : vector<64x1xf32>
    %20 = math.rsqrt %19 : vector<64x1xf32>
    %21 = vector.broadcast %20 : vector<64x1xf32> to vector<64x128xf32>
    %22 = arith.mulf %0, %21 : vector<64x128xf32>
    %23 = vector.broadcast %1 : vector<1x128xf32> to vector<64x128xf32>
    %24 = arith.mulf %22, %23 : vector<64x128xf32>
    %25 = arith.truncf %24 : vector<64x128xf32> to vector<64x128xbf16>
    %c0_18 = arith.constant 0 : index
    %c0_19 = arith.constant 0 : index
    %26 = vector.load %arg2[%c0_18, %c0_19] : memref<128x256xbf16, #tpu.memory_space<vmem>>, vector<128x256xbf16>
    %cst_20 = arith.constant dense<0.000000e+00> : vector<64x256xf32>
    %27 = tpu.matmul %25, %26, %cst_20 {dimension_numbers = #tpu.dot_dimension_numbers<[1], [0], [0], [1], [0, 0, 1, 1], [], []>} : vector<64x128xbf16>, vector<128x256xbf16>, vector<64x256xf32> -> vector<64x256xf32>
    %28 = vector.extract_strided_slice %27 {offsets = [0, 0], sizes = [64, 128], strides = [1, 1]} : vector<64x256xf32> to vector<64x128xf32>
    %29 = vector.broadcast %2 : vector<1x128xf32> to vector<64x128xf32>
    %30 = arith.addf %28, %29 : vector<64x128xf32>
    %31 = vector.extract_strided_slice %27 {offsets = [0, 128], sizes = [64, 128], strides = [1, 1]} : vector<64x256xf32> to vector<64x128xf32>
    %32 = vector.broadcast %3 : vector<1x128xf32> to vector<64x128xf32>
    %33 = arith.addf %31, %32 : vector<64x128xf32>
    %34 = arith.truncf %30 : vector<64x128xf32> to vector<64x128xbf16>
    %c0_21 = arith.constant 0 : index
    %c0_22 = arith.constant 0 : index
    %35 = vector.load %arg3[%c0_21, %c0_22] : memref<64x64xbf16, #tpu.memory_space<vmem>>, vector<64x64xbf16>
    %cst_23 = arith.constant dense<0.000000e+00> : vector<64x128xf32>
    %36 = tpu.matmul %35, %34, %cst_23 {dimension_numbers = #tpu.dot_dimension_numbers<[1], [0], [0], [1], [0, 0, 1, 1], [], []>} : vector<64x64xbf16>, vector<64x128xbf16>, vector<64x128xf32> -> vector<64x128xf32>
    %c0_24 = arith.constant 0 : index
    %c0_25 = arith.constant 0 : index
    %37 = vector.load %arg4[%c0_24, %c0_25] : memref<64x64xbf16, #tpu.memory_space<vmem>>, vector<64x64xbf16>
    %cst_26 = arith.constant dense<0.000000e+00> : vector<64x128xf32>
    %38 = tpu.matmul %37, %34, %cst_26 {dimension_numbers = #tpu.dot_dimension_numbers<[1], [0], [0], [1], [0, 0, 1, 1], [], []>} : vector<64x64xbf16>, vector<64x128xbf16>, vector<64x128xf32> -> vector<64x128xf32>
    %39 = tpu.concatenate %36, %38 in 1 : vector<64x128xf32>, vector<64x128xf32> -> vector<64x256xf32>
    %40 = arith.truncf %39 : vector<64x256xf32> to vector<64x256xbf16>
    %c0_27 = arith.constant 0 : index
    %c0_28 = arith.constant 0 : index
    %41 = vector.load %arg5[%c0_27, %c0_28] : memref<256x128xbf16, #tpu.memory_space<vmem>>, vector<256x128xbf16>
    %cst_29 = arith.constant dense<0.000000e+00> : vector<64x128xf32>
    %42 = tpu.matmul %40, %41, %cst_29 {dimension_numbers = #tpu.dot_dimension_numbers<[1], [0], [0], [1], [0, 0, 1, 1], [], []>} : vector<64x256xbf16>, vector<256x128xbf16>, vector<64x128xf32> -> vector<64x128xf32>
    %43 = arith.mulf %42, %42 : vector<64x128xf32>
    %44 = arith.mulf %42, %43 : vector<64x128xf32>
    %cst_30 = arith.constant 4.471500e-02 : f32
    %45 = vector.broadcast %cst_30 : f32 to vector<64x128xf32>
    %46 = arith.mulf %45, %44 : vector<64x128xf32>
    %47 = arith.addf %42, %46 : vector<64x128xf32>
    %cst_31 = arith.constant 0.797884583 : f32
    %48 = vector.broadcast %cst_31 : f32 to vector<64x128xf32>
    %49 = arith.mulf %48, %47 : vector<64x128xf32>
    %50 = math.tanh %49 : vector<64x128xf32>
    %cst_32 = arith.constant 1.000000e+00 : f32
    %51 = vector.broadcast %cst_32 : f32 to vector<64x128xf32>
    %52 = arith.addf %51, %50 : vector<64x128xf32>
    %cst_33 = arith.constant 5.000000e-01 : f32
    %53 = vector.broadcast %cst_33 : f32 to vector<64x128xf32>
    %54 = arith.mulf %53, %52 : vector<64x128xf32>
    %55 = arith.mulf %42, %54 : vector<64x128xf32>
    %56 = arith.mulf %33, %33 : vector<64x128xf32>
    %cst_34 = arith.constant dense<0.000000e+00> : vector<64xf32>
    %57 = vector.multi_reduction <add>, %56, %cst_34 [1] : vector<64x128xf32> to vector<64xf32>
    %58 = vector.shape_cast %57 : vector<64xf32> to vector<64x1xf32>
    %cst_35 = arith.constant 1.280000e+02 : f32
    %59 = vector.broadcast %cst_35 : f32 to vector<64x1xf32>
    %60 = arith.divf %58, %59 : vector<64x1xf32>
    %cst_36 = arith.constant 9.99999993E-9 : f32
    %61 = vector.broadcast %cst_36 : f32 to vector<64x1xf32>
    %62 = arith.addf %60, %61 : vector<64x1xf32>
    %63 = math.rsqrt %62 : vector<64x1xf32>
    %64 = vector.broadcast %63 : vector<64x1xf32> to vector<64x128xf32>
    %65 = arith.mulf %33, %64 : vector<64x128xf32>
    %66 = vector.broadcast %4 : vector<1x128xf32> to vector<64x128xf32>
    %67 = arith.mulf %65, %66 : vector<64x128xf32>
    %68 = arith.truncf %67 : vector<64x128xf32> to vector<64x128xbf16>
    %c0_37 = arith.constant 0 : index
    %c0_38 = arith.constant 0 : index
    %69 = vector.load %arg6[%c0_37, %c0_38] : memref<128x256xbf16, #tpu.memory_space<vmem>>, vector<128x256xbf16>
    %cst_39 = arith.constant dense<0.000000e+00> : vector<64x256xf32>
    %70 = tpu.matmul %68, %69, %cst_39 {dimension_numbers = #tpu.dot_dimension_numbers<[1], [0], [0], [1], [0, 0, 1, 1], [], []>} : vector<64x128xbf16>, vector<128x256xbf16>, vector<64x256xf32> -> vector<64x256xf32>
    %71 = vector.extract_strided_slice %70 {offsets = [0, 0], sizes = [64, 128], strides = [1, 1]} : vector<64x256xf32> to vector<64x128xf32>
    %72 = vector.broadcast %5 : vector<1x128xf32> to vector<64x128xf32>
    %73 = arith.addf %71, %72 : vector<64x128xf32>
    %74 = arith.mulf %73, %73 : vector<64x128xf32>
    %75 = arith.mulf %73, %74 : vector<64x128xf32>
    %cst_40 = arith.constant 4.471500e-02 : f32
    %76 = vector.broadcast %cst_40 : f32 to vector<64x128xf32>
    %77 = arith.mulf %76, %75 : vector<64x128xf32>
    %78 = arith.addf %73, %77 : vector<64x128xf32>
    %cst_41 = arith.constant 0.797884583 : f32
    %79 = vector.broadcast %cst_41 : f32 to vector<64x128xf32>
    %80 = arith.mulf %79, %78 : vector<64x128xf32>
    %81 = math.tanh %80 : vector<64x128xf32>
    %cst_42 = arith.constant 1.000000e+00 : f32
    %82 = vector.broadcast %cst_42 : f32 to vector<64x128xf32>
    %83 = arith.addf %82, %81 : vector<64x128xf32>
    %cst_43 = arith.constant 5.000000e-01 : f32
    %84 = vector.broadcast %cst_43 : f32 to vector<64x128xf32>
    %85 = arith.mulf %84, %83 : vector<64x128xf32>
    %86 = arith.mulf %73, %85 : vector<64x128xf32>
    %87 = vector.extract_strided_slice %70 {offsets = [0, 128], sizes = [64, 128], strides = [1, 1]} : vector<64x256xf32> to vector<64x128xf32>
    %88 = vector.broadcast %6 : vector<1x128xf32> to vector<64x128xf32>
    %89 = arith.addf %87, %88 : vector<64x128xf32>
    %90 = arith.mulf %89, %89 : vector<64x128xf32>
    %91 = arith.mulf %89, %90 : vector<64x128xf32>
    %cst_44 = arith.constant 4.471500e-02 : f32
    %92 = vector.broadcast %cst_44 : f32 to vector<64x128xf32>
    %93 = arith.mulf %92, %91 : vector<64x128xf32>
    %94 = arith.addf %89, %93 : vector<64x128xf32>
    %cst_45 = arith.constant 0.797884583 : f32
    %95 = vector.broadcast %cst_45 : f32 to vector<64x128xf32>
    %96 = arith.mulf %95, %94 : vector<64x128xf32>
    %97 = math.tanh %96 : vector<64x128xf32>
    %cst_46 = arith.constant 1.000000e+00 : f32
    %98 = vector.broadcast %cst_46 : f32 to vector<64x128xf32>
    %99 = arith.addf %98, %97 : vector<64x128xf32>
    %cst_47 = arith.constant 5.000000e-01 : f32
    %100 = vector.broadcast %cst_47 : f32 to vector<64x128xf32>
    %101 = arith.mulf %100, %99 : vector<64x128xf32>
    %102 = arith.mulf %89, %101 : vector<64x128xf32>
    %103 = arith.mulf %102, %102 : vector<64x128xf32>
    %cst_48 = arith.constant dense<0.000000e+00> : vector<64xf32>
    %104 = vector.multi_reduction <add>, %103, %cst_48 [1] : vector<64x128xf32> to vector<64xf32>
    %105 = vector.shape_cast %104 : vector<64xf32> to vector<64x1xf32>
    %cst_49 = arith.constant 1.280000e+02 : f32
    %106 = vector.broadcast %cst_49 : f32 to vector<64x1xf32>
    %107 = arith.divf %105, %106 : vector<64x1xf32>
    %cst_50 = arith.constant 9.99999993E-9 : f32
    %108 = vector.broadcast %cst_50 : f32 to vector<64x1xf32>
    %109 = arith.addf %107, %108 : vector<64x1xf32>
    %110 = math.rsqrt %109 : vector<64x1xf32>
    %111 = vector.broadcast %110 : vector<64x1xf32> to vector<64x128xf32>
    %112 = arith.mulf %102, %111 : vector<64x128xf32>
    %113 = vector.broadcast %7 : vector<1x128xf32> to vector<64x128xf32>
    %114 = arith.mulf %112, %113 : vector<64x128xf32>
    %c0_51 = arith.constant 0 : index
    %c0_52 = arith.constant 0 : index
    %115 = vector.load %arg7[%c0_51, %c0_52] : memref<64x64xbf16, #tpu.memory_space<vmem>>, vector<64x64xbf16>
    %116 = arith.truncf %114 : vector<64x128xf32> to vector<64x128xbf16>
    %cst_53 = arith.constant dense<0.000000e+00> : vector<64x128xf32>
    %117 = tpu.matmul %115, %116, %cst_53 {dimension_numbers = #tpu.dot_dimension_numbers<[1], [0], [0], [1], [0, 0, 1, 1], [], []>} : vector<64x64xbf16>, vector<64x128xbf16>, vector<64x128xf32> -> vector<64x128xf32>
    %c0_54 = arith.constant 0 : index
    %c0_55 = arith.constant 0 : index
    %118 = vector.load %arg14[%c0_54, %c0_55] : memref<64x1xf32, #tpu.memory_space<vmem>>, vector<64x1xf32>
    %119 = vector.broadcast %118 : vector<64x1xf32> to vector<64x128xf32>
    %120 = arith.addf %117, %119 : vector<64x128xf32>
    %121 = arith.mulf %86, %120 : vector<64x128xf32>
    %122 = arith.truncf %121 : vector<64x128xf32> to vector<64x128xbf16>
    %c0_56 = arith.constant 0 : index
    %c0_57 = arith.constant 0 : index
    %123 = vector.load %arg8[%c0_56, %c0_57] : memref<128x128xbf16, #tpu.memory_space<vmem>>, vector<128x128xbf16>
    %cst_58 = arith.constant dense<0.000000e+00> : vector<64x128xf32>
    %124 = tpu.matmul %122, %123, %cst_58 {dimension_numbers = #tpu.dot_dimension_numbers<[1], [0], [0], [1], [0, 0, 1, 1], [], []>} : vector<64x128xbf16>, vector<128x128xbf16>, vector<64x128xf32> -> vector<64x128xf32>
    %125 = vector.broadcast %8 : vector<1x128xf32> to vector<64x128xf32>
    %126 = arith.addf %124, %125 : vector<64x128xf32>
    %127 = arith.addf %126, %33 : vector<64x128xf32>
    %128 = tpu.concatenate %55, %127 in 1 : vector<64x128xf32>, vector<64x128xf32> -> vector<64x256xf32>
    %129 = arith.truncf %128 : vector<64x256xf32> to vector<64x256xbf16>
    %c0_59 = arith.constant 0 : index
    %c0_60 = arith.constant 0 : index
    %130 = vector.load %arg9[%c0_59, %c0_60] : memref<256x256xbf16, #tpu.memory_space<vmem>>, vector<256x256xbf16>
    %cst_61 = arith.constant dense<0.000000e+00> : vector<64x256xf32>
    %131 = tpu.matmul %129, %130, %cst_61 {dimension_numbers = #tpu.dot_dimension_numbers<[1], [0], [0], [1], [0, 0, 1, 1], [], []>} : vector<64x256xbf16>, vector<256x256xbf16>, vector<64x256xf32> -> vector<64x256xf32>
    %132 = vector.broadcast %11 : vector<1x256xf32> to vector<64x256xf32>
    %133 = arith.addf %131, %132 : vector<64x256xf32>
    %134 = vector.extract_strided_slice %133 {offsets = [0, 0], sizes = [64, 128], strides = [1, 1]} : vector<64x256xf32> to vector<64x128xf32>
    %135 = arith.mulf %134, %134 : vector<64x128xf32>
    %136 = arith.mulf %134, %135 : vector<64x128xf32>
    %cst_62 = arith.constant 4.471500e-02 : f32
    %137 = vector.broadcast %cst_62 : f32 to vector<64x128xf32>
    %138 = arith.mulf %137, %136 : vector<64x128xf32>
    %139 = arith.addf %134, %138 : vector<64x128xf32>
    %cst_63 = arith.constant 0.797884583 : f32
    %140 = vector.broadcast %cst_63 : f32 to vector<64x128xf32>
    %141 = arith.mulf %140, %139 : vector<64x128xf32>
    %142 = math.tanh %141 : vector<64x128xf32>
    %cst_64 = arith.constant 1.000000e+00 : f32
    %143 = vector.broadcast %cst_64 : f32 to vector<64x128xf32>
    %144 = arith.addf %143, %142 : vector<64x128xf32>
    %cst_65 = arith.constant 5.000000e-01 : f32
    %145 = vector.broadcast %cst_65 : f32 to vector<64x128xf32>
    %146 = arith.mulf %145, %144 : vector<64x128xf32>
    %147 = arith.mulf %134, %146 : vector<64x128xf32>
    %148 = vector.extract_strided_slice %133 {offsets = [0, 128], sizes = [64, 128], strides = [1, 1]} : vector<64x256xf32> to vector<64x128xf32>
    %149 = arith.mulf %147, %148 : vector<64x128xf32>
    %150 = arith.addf %149, %0 : vector<64x128xf32>
    %151 = arith.mulf %150, %150 : vector<64x128xf32>
    %cst_66 = arith.constant dense<0.000000e+00> : vector<64xf32>
    %152 = vector.multi_reduction <add>, %151, %cst_66 [1] : vector<64x128xf32> to vector<64xf32>
    %153 = vector.shape_cast %152 : vector<64xf32> to vector<64x1xf32>
    %cst_67 = arith.constant 1.280000e+02 : f32
    %154 = vector.broadcast %cst_67 : f32 to vector<64x1xf32>
    %155 = arith.divf %153, %154 : vector<64x1xf32>
    %cst_68 = arith.constant 9.99999993E-9 : f32
    %156 = vector.broadcast %cst_68 : f32 to vector<64x1xf32>
    %157 = arith.addf %155, %156 : vector<64x1xf32>
    %158 = math.rsqrt %157 : vector<64x1xf32>
    %159 = vector.broadcast %158 : vector<64x1xf32> to vector<64x128xf32>
    %160 = arith.mulf %150, %159 : vector<64x128xf32>
    %161 = vector.broadcast %9 : vector<1x128xf32> to vector<64x128xf32>
    %162 = arith.mulf %160, %161 : vector<64x128xf32>
    %163 = arith.truncf %162 : vector<64x128xf32> to vector<64x128xbf16>
    %c0_69 = arith.constant 0 : index
    %c0_70 = arith.constant 0 : index
    %164 = vector.load %arg10[%c0_69, %c0_70] : memref<128x256xbf16, #tpu.memory_space<vmem>>, vector<128x256xbf16>
    %cst_71 = arith.constant dense<0.000000e+00> : vector<64x256xf32>
    %165 = tpu.matmul %163, %164, %cst_71 {dimension_numbers = #tpu.dot_dimension_numbers<[1], [0], [0], [1], [0, 0, 1, 1], [], []>} : vector<64x128xbf16>, vector<128x256xbf16>, vector<64x256xf32> -> vector<64x256xf32>
    %166 = vector.broadcast %12 : vector<1x256xf32> to vector<64x256xf32>
    %167 = arith.addf %165, %166 : vector<64x256xf32>
    %168 = arith.mulf %167, %167 : vector<64x256xf32>
    %169 = arith.mulf %167, %168 : vector<64x256xf32>
    %cst_72 = arith.constant 4.471500e-02 : f32
    %170 = vector.broadcast %cst_72 : f32 to vector<64x256xf32>
    %171 = arith.mulf %170, %169 : vector<64x256xf32>
    %172 = arith.addf %167, %171 : vector<64x256xf32>
    %cst_73 = arith.constant 0.797884583 : f32
    %173 = vector.broadcast %cst_73 : f32 to vector<64x256xf32>
    %174 = arith.mulf %173, %172 : vector<64x256xf32>
    %175 = math.tanh %174 : vector<64x256xf32>
    %cst_74 = arith.constant 1.000000e+00 : f32
    %176 = vector.broadcast %cst_74 : f32 to vector<64x256xf32>
    %177 = arith.addf %176, %175 : vector<64x256xf32>
    %cst_75 = arith.constant 5.000000e-01 : f32
    %178 = vector.broadcast %cst_75 : f32 to vector<64x256xf32>
    %179 = arith.mulf %178, %177 : vector<64x256xf32>
    %180 = arith.mulf %167, %179 : vector<64x256xf32>
    %181 = arith.truncf %180 : vector<64x256xf32> to vector<64x256xbf16>
    %c0_76 = arith.constant 0 : index
    %c0_77 = arith.constant 0 : index
    %182 = vector.load %arg11[%c0_76, %c0_77] : memref<256x128xbf16, #tpu.memory_space<vmem>>, vector<256x128xbf16>
    %cst_78 = arith.constant dense<0.000000e+00> : vector<64x128xf32>
    %183 = tpu.matmul %181, %182, %cst_78 {dimension_numbers = #tpu.dot_dimension_numbers<[1], [0], [0], [1], [0, 0, 1, 1], [], []>} : vector<64x256xbf16>, vector<256x128xbf16>, vector<64x128xf32> -> vector<64x128xf32>
    %184 = vector.broadcast %10 : vector<1x128xf32> to vector<64x128xf32>
    %185 = arith.addf %183, %184 : vector<64x128xf32>
    %186 = arith.addf %185, %162 : vector<64x128xf32>
    %c0_79 = arith.constant 0 : index
    %c0_80 = arith.constant 0 : index
    %187 = vector.load %arg15[%c0_79, %c0_80] : memref<64x128xf32, #tpu.memory_space<vmem>>, vector<64x128xf32>
    tpu.vector_store %arg15[%c0_79, %c0_80], %186 {strides = array<i32>} : memref<64x128xf32, #tpu.memory_space<vmem>>, vector<64x128xf32>,
    return
  }
  func.func @transform_0(%arg0: i32) -> (i32, i32) {
    %c0_i32 = arith.constant 0 : i32
    %c0_i32_0 = arith.constant 0 : i32
    return %arg0, %c0_i32 : i32, i32
  }
  func.func @transform_1(%arg0: i32) -> (i32, i32) {
    %c0_i32 = arith.constant 0 : i32
    %c0_i32_0 = arith.constant 0 : i32
    %c0_i32_1 = arith.constant 0 : i32
    return %c0_i32, %c0_i32_0 : i32, i32
  }
  func.func @transform_2(%arg0: i32) -> (i32, i32) {
    %c0_i32 = arith.constant 0 : i32
    %c0_i32_0 = arith.constant 0 : i32
    %c0_i32_1 = arith.constant 0 : i32
    return %c0_i32, %c0_i32_0 : i32, i32
  }
  func.func @transform_3(%arg0: i32) -> (i32, i32) {
    %c0_i32 = arith.constant 0 : i32
    %c0_i32_0 = arith.constant 0 : i32
    %c0_i32_1 = arith.constant 0 : i32
    return %c0_i32, %c0_i32_0 : i32, i32
  }
  func.func @transform_4(%arg0: i32) -> (i32, i32) {
    %c0_i32 = arith.constant 0 : i32
    %c0_i32_0 = arith.constant 0 : i32
    %c0_i32_1 = arith.constant 0 : i32
    return %c0_i32, %c0_i32_0 : i32, i32
  }
  func.func @transform_5(%arg0: i32) -> (i32, i32) {
    %c0_i32 = arith.constant 0 : i32
    %c0_i32_0 = arith.constant 0 : i32
    %c0_i32_1 = arith.constant 0 : i32
    return %c0_i32, %c0_i32_0 : i32, i32
  }
  func.func @transform_6(%arg0: i32) -> (i32, i32) {
    %c0_i32 = arith.constant 0 : i32
    %c0_i32_0 = arith.constant 0 : i32
    %c0_i32_1 = arith.constant 0 : i32
    return %c0_i32, %c0_i32_0 : i32, i32
  }
  func.func @transform_7(%arg0: i32) -> (i32, i32) {
    %c0_i32 = arith.constant 0 : i32
    %c0_i32_0 = arith.constant 0 : i32
    %c0_i32_1 = arith.constant 0 : i32
    return %c0_i32, %c0_i32_0 : i32, i32
  }
  func.func @transform_8(%arg0: i32) -> (i32, i32) {
    %c0_i32 = arith.constant 0 : i32
    %c0_i32_0 = arith.constant 0 : i32
    %c0_i32_1 = arith.constant 0 : i32
    return %c0_i32, %c0_i32_0 : i32, i32
  }
  func.func @transform_9(%arg0: i32) -> (i32, i32) {
    %c0_i32 = arith.constant 0 : i32
    %c0_i32_0 = arith.constant 0 : i32
    %c0_i32_1 = arith.constant 0 : i32
    return %c0_i32, %c0_i32_0 : i32, i32
  }
  func.func @transform_10(%arg0: i32) -> (i32, i32) {
    %c0_i32 = arith.constant 0 : i32
    %c0_i32_0 = arith.constant 0 : i32
    %c0_i32_1 = arith.constant 0 : i32
    return %c0_i32, %c0_i32_0 : i32, i32
  }
  func.func @transform_11(%arg0: i32) -> (i32, i32) {
    %c0_i32 = arith.constant 0 : i32
    %c0_i32_0 = arith.constant 0 : i32
    %c0_i32_1 = arith.constant 0 : i32
    return %c0_i32, %c0_i32_0 : i32, i32
  }
  func.func @transform_12(%arg0: i32) -> (i32, i32) {
    %c0_i32 = arith.constant 0 : i32
    %c0_i32_0 = arith.constant 0 : i32
    %c0_i32_1 = arith.constant 0 : i32
    return %c0_i32, %c0_i32_0 : i32, i32
  }
  func.func @transform_13(%arg0: i32) -> (i32, i32) {
    %c0_i32 = arith.constant 0 : i32
    %c0_i32_0 = arith.constant 0 : i32
    %c0_i32_1 = arith.constant 0 : i32
    return %c0_i32, %c0_i32_0 : i32, i32
  }
  func.func @transform_14(%arg0: i32) -> (i32, i32) {
    %c0_i32 = arith.constant 0 : i32
    %c0_i32_0 = arith.constant 0 : i32
    return %arg0, %c0_i32 : i32, i32
  }
}

</mosaic_0001>

<llo_original>
// kernel: tpu_custom_call.1
$region0: #{tpu_custom_call.1}
  #allocation0 [shape = 'u32[]', space=smem, size = 0x4, offset = 0x4, fixed_abs, tag = 'smem constant byte address 0x4 - core index']
  #allocation1 [shape = 'u32[144,128]{1,0:T(1,128)}', space=vmem, size = 0x12000, scoped, tag = 'internal scratch']
  %s0 = inlined_call_operand.vmem [shape: f32[64,128], index: 0, kind: input, shape index: {}]
  %s1 = inlined_call_operand.hbm [shape: bf16[128,256], index: 1, kind: input, shape index: {}]
  %s2 = inlined_call_operand.hbm [shape: bf16[64,64], index: 2, kind: input, shape index: {}]
  %s3 = inlined_call_operand.hbm [shape: bf16[64,64], index: 3, kind: input, shape index: {}]
  %s4 = inlined_call_operand.hbm [shape: bf16[256,128], index: 4, kind: input, shape index: {}]
  %s5 = inlined_call_operand.hbm [shape: bf16[128,256], index: 5, kind: input, shape index: {}]
  %s6 = inlined_call_operand.hbm [shape: bf16[64,64], index: 6, kind: input, shape index: {}]
  %s7 = inlined_call_operand.hbm [shape: bf16[128,128], index: 7, kind: input, shape index: {}]
  %s8 = inlined_call_operand.hbm [shape: bf16[256,256], index: 8, kind: input, shape index: {}]
  %s9 = inlined_call_operand.hbm [shape: bf16[128,256], index: 9, kind: input, shape index: {}]
  %s10 = inlined_call_operand.hbm [shape: bf16[256,128], index: 10, kind: input, shape index: {}]
  %s11 = inlined_call_operand.vmem [shape: f32[16,128], index: 11, kind: input, shape index: {}]
  %s12 = inlined_call_operand.vmem [shape: f32[2,256], index: 12, kind: input, shape index: {}]
  %s13 = inlined_call_operand.vmem [shape: f32[64,1], index: 13, kind: input, shape index: {}]
  %s14 = inlined_call_operand.hbm [shape: f32[64,128], index: 14, kind: output, shape index: {}]
  %s15 = sld [smem:[#allocation0]]
  $region106: #{tpu_custom_call.1} parent=0
    _
  %s17 = ssub.s32 1, %s15
  %s18 = scalar_select 0, %s17, %s15
  $region1: #{tpu_custom_call.1} parent=0
    #allocation2 [shape = 'u8[65536]{0}', space=vmem, size = 0x10000, scoped, tag = 'input window, operand 1, single buffered']
    #allocation3 [shape = 's32[1]{0}', space=sflag, size = 0x4, scoped, tag = 'scoped memory for tpu_custom_call.1']
    #allocation4 [shape = 's32[1]{0}', space=sflag, size = 0x4, scoped, tag = 'scoped memory for tpu_custom_call.1']
    #allocation5 [shape = 'u8[16384]{0}', space=vmem, size = 0x4000, scoped, tag = 'input window, operand 2, single buffered']
    #allocation6 [shape = 's32[1]{0}', space=sflag, size = 0x4, scoped, tag = 'scoped memory for tpu_custom_call.1']
    #allocation7 [shape = 'u8[16384]{0}', space=vmem, size = 0x4000, scoped, tag = 'input window, operand 3, single buffered']
    #allocation8 [shape = 'u8[65536]{0}', space=vmem, size = 0x10000, scoped, tag = 'input window, operand 4, single buffered']
    #allocation9 [shape = 's32[1]{0}', space=sflag, size = 0x4, scoped, tag = 'scoped memory for tpu_custom_call.1']
    #allocation10 [shape = 'u8[65536]{0}', space=vmem, size = 0x10000, scoped, tag = 'input window, operand 5, single buffered']
    #allocation11 [shape = 'u8[16384]{0}', space=vmem, size = 0x4000, scoped, tag = 'input window, operand 6, single buffered']
    #allocation12 [shape = 's32[1]{0}', space=sflag, size = 0x4, scoped, tag = 'scoped memory for tpu_custom_call.1']
    #allocation13 [shape = 'u8[32768]{0}', space=vmem, size = 0x8000, scoped, tag = 'input window, operand 7, single buffered']
    #allocation14 [shape = 'u8[131072]{0}', space=vmem, size = 0x20000, scoped, tag = 'input window, operand 8, single buffered']
    #allocation15 [shape = 's32[1]{0}', space=sflag, size = 0x4, scoped, tag = 'scoped memory for tpu_custom_call.1']
    #allocation16 [shape = 'u8[65536]{0}', space=vmem, size = 0x10000, scoped, tag = 'input window, operand 9, single buffered']
    #allocation17 [shape = 'u8[65536]{0}', space=vmem, size = 0x10000, scoped, tag = 'input window, operand 10, single buffered']
    #allocation18 [shape = 's32[1]{0}', space=sflag, size = 0x4, scoped, tag = 'scoped memory for tpu_custom_call.1']
    #allocation19 [shape = 'u8[32768]{0}', space=vmem, size = 0x8000, scoped, tag = 'output window, operand 0, single buffered']
    %19 = vsyncpa [#allocation3], 0
    %20 = vsyncpa [#allocation6], 0
    %21 = vsyncpa [#allocation9], 0
    %22 = vsyncpa [#allocation12], 0
    %23 = vsyncpa [#allocation15], 0
    %24 = vsyncpa [#allocation18], 0
    %25 = vsyncpa [#allocation4], 0
    // Predicated region
    $region2: #{tpu_custom_call.1} parent=1 // pred_check
      _
    $region3: #{tpu_custom_call.1} parent=1 // pred_check_branch
      %27 = sbr.rel (0) target = $region5
    $region4: #{tpu_custom_call.1} parent=1 // pred_region
      _
    $region5: #{tpu_custom_call.1} parent=1 // pred_fallthru
      _
    // Predicated region
    $region6: #{tpu_custom_call.1} parent=1 // pred_check
      _
    $region7: #{tpu_custom_call.1} parent=1 // pred_check_branch
      %29 = sbr.rel (0) target = $region9
    $region8: #{tpu_custom_call.1} parent=1 // pred_region
      %s31 = ssub.s32 2048, 2048
      %32 = vsyncadd [#allocation3], %s31
      %s33 = sshll.u32 [#allocation2], 4
      %s34 = int_to_ptr.vmem [resolvable:$true] %s33
      %39 = dma.hbm_to_vmem [thread:$0]  %s1, 2048, %s34, [#allocation3], 128, 128, 8
    $region9: #{tpu_custom_call.1} parent=1 // pred_fallthru
      _
    // Predicated region
    $region10: #{tpu_custom_call.1} parent=1 // pred_check
      _
    $region11: #{tpu_custom_call.1} parent=1 // pred_check_branch
      %41 = sbr.rel (0) target = $region13
    $region12: #{tpu_custom_call.1} parent=1 // pred_region
      %s43 = ssub.s32 512, 512
      %44 = vsyncadd [#allocation6], %s43
      %s45 = sshll.u32 [#allocation5], 4
      %s46 = int_to_ptr.vmem [resolvable:$true] %s45
      %51 = dma.hbm_to_vmem [thread:$0]  %s2, 512, %s46, [#allocation6], 64, 64, 4
    $region13: #{tpu_custom_call.1} parent=1 // pred_fallthru
      _
    // Predicated region
    $region14: #{tpu_custom_call.1} parent=1 // pred_check
      _
    $region15: #{tpu_custom_call.1} parent=1 // pred_check_branch
      %53 = sbr.rel (0) target = $region17
    $region16: #{tpu_custom_call.1} parent=1 // pred_region
      %s55 = ssub.s32 512, 512
      %56 = vsyncadd [#allocation6], %s55
      %s57 = sshll.u32 [#allocation7], 4
      %s58 = int_to_ptr.vmem [resolvable:$true] %s57
      %63 = dma.hbm_to_vmem [thread:$0]  %s3, 512, %s58, [#allocation6], 64, 64, 4
    $region17: #{tpu_custom_call.1} parent=1 // pred_fallthru
      _
    // Predicated region
    $region18: #{tpu_custom_call.1} parent=1 // pred_check
      _
    $region19: #{tpu_custom_call.1} parent=1 // pred_check_branch
      %65 = sbr.rel (0) target = $region21
    $region20: #{tpu_custom_call.1} parent=1 // pred_region
      %s67 = ssub.s32 2048, 2048
      %68 = vsyncadd [#allocation9], %s67
      %s69 = sshll.u32 [#allocation8], 4
      %s70 = int_to_ptr.vmem [resolvable:$true] %s69
      %75 = dma.hbm_to_vmem [thread:$0]  %s4, 2048, %s70, [#allocation9], 64, 64, 4
    $region21: #{tpu_custom_call.1} parent=1 // pred_fallthru
      _
    // Predicated region
    $region22: #{tpu_custom_call.1} parent=1 // pred_check
      _
    $region23: #{tpu_custom_call.1} parent=1 // pred_check_branch
      %77 = sbr.rel (0) target = $region25
    $region24: #{tpu_custom_call.1} parent=1 // pred_region
      %s79 = ssub.s32 2048, 2048
      %80 = vsyncadd [#allocation9], %s79
      %s81 = sshll.u32 [#allocation10], 4
      %s82 = int_to_ptr.vmem [resolvable:$true] %s81
      %87 = dma.hbm_to_vmem [thread:$0]  %s5, 2048, %s82, [#allocation9], 128, 128, 8
    $region25: #{tpu_custom_call.1} parent=1 // pred_fallthru
      _
    // Predicated region
    $region26: #{tpu_custom_call.1} parent=1 // pred_check
      _
    $region27: #{tpu_custom_call.1} parent=1 // pred_check_branch
      %89 = sbr.rel (0) target = $region29
    $region28: #{tpu_custom_call.1} parent=1 // pred_region
      %s91 = ssub.s32 512, 512
      %92 = vsyncadd [#allocation12], %s91
      %s93 = sshll.u32 [#allocation11], 4
      %s94 = int_to_ptr.vmem [resolvable:$true] %s93
      %99 = dma.hbm_to_vmem [thread:$0]  %s6, 512, %s94, [#allocation12], 64, 64, 4
    $region29: #{tpu_custom_call.1} parent=1 // pred_fallthru
      _
    // Predicated region
    $region30: #{tpu_custom_call.1} parent=1 // pred_check
      _
    $region31: #{tpu_custom_call.1} parent=1 // pred_check_branch
      %101 = sbr.rel (0) target = $region33
    $region32: #{tpu_custom_call.1} parent=1 // pred_region
      %s103 = ssub.s32 1024, 1024
      %104 = vsyncadd [#allocation12], %s103
      %s105 = sshll.u32 [#allocation13], 4
      %s106 = int_to_ptr.vmem [resolvable:$true] %s105
      %111 = dma.hbm_to_vmem [thread:$0]  %s7, 1024, %s106, [#allocation12], 64, 64, 4
    $region33: #{tpu_custom_call.1} parent=1 // pred_fallthru
      _
    // Predicated region
    $region34: #{tpu_custom_call.1} parent=1 // pred_check
      _
    $region35: #{tpu_custom_call.1} parent=1 // pred_check_branch
      %113 = sbr.rel (0) target = $region37
    $region36: #{tpu_custom_call.1} parent=1 // pred_region
      %s115 = ssub.s32 4096, 4096
      %116 = vsyncadd [#allocation15], %s115
      %s117 = sshll.u32 [#allocation14], 4
      %s118 = int_to_ptr.vmem [resolvable:$true] %s117
      %123 = dma.hbm_to_vmem [thread:$0]  %s8, 4096, %s118, [#allocation15], 128, 128, 8
    $region37: #{tpu_custom_call.1} parent=1 // pred_fallthru
      _
    // Predicated region
    $region38: #{tpu_custom_call.1} parent=1 // pred_check
      _
    $region39: #{tpu_custom_call.1} parent=1 // pred_check_branch
      %125 = sbr.rel (0) target = $region41
    $region40: #{tpu_custom_call.1} parent=1 // pred_region
      %s127 = ssub.s32 2048, 2048
      %128 = vsyncadd [#allocation15], %s127
      %s129 = sshll.u32 [#allocation16], 4
      %s130 = int_to_ptr.vmem [resolvable:$true] %s129
      %135 = dma.hbm_to_vmem [thread:$0]  %s9, 2048, %s130, [#allocation15], 128, 128, 8
    $region41: #{tpu_custom_call.1} parent=1 // pred_fallthru
      _
    // Predicated region
    $region42: #{tpu_custom_call.1} parent=1 // pred_check
      _
    $region43: #{tpu_custom_call.1} parent=1 // pred_check_branch
      %137 = sbr.rel (0) target = $region45
    $region44: #{tpu_custom_call.1} parent=1 // pred_region
      %s139 = ssub.s32 2048, 2048
      %140 = vsyncadd [#allocation18], %s139
      %s141 = sshll.u32 [#allocation17], 4
      %s142 = int_to_ptr.vmem [resolvable:$true] %s141
      %147 = dma.hbm_to_vmem [thread:$0]  %s10, 2048, %s142, [#allocation18], 64, 64, 4
    $region45: #{tpu_custom_call.1} parent=1 // pred_fallthru
      _
    // Predicated region
    $region46: #{tpu_custom_call.1} parent=1 // pred_check
      _
    $region47: #{tpu_custom_call.1} parent=1 // pred_check_branch
      %149 = sbr.rel (0) target = $region49
    $region48: #{tpu_custom_call.1} parent=1 // pred_region
      _
    $region49: #{tpu_custom_call.1} parent=1 // pred_fallthru
      _
    // Predicated region
    $region50: #{tpu_custom_call.1} parent=1 // pred_check
      _
    $region51: #{tpu_custom_call.1} parent=1 // pred_check_branch
      %151 = sbr.rel (0) target = $region53
    $region52: #{tpu_custom_call.1} parent=1 // pred_region
      _
    $region53: #{tpu_custom_call.1} parent=1 // pred_fallthru
      _
    // Predicated region
    $region54: #{tpu_custom_call.1} parent=1 // pred_check
      _
    $region55: #{tpu_custom_call.1} parent=1 // pred_check_branch
      %153 = sbr.rel (0) target = $region57
    $region56: #{tpu_custom_call.1} parent=1 // pred_region
      _
    $region57: #{tpu_custom_call.1} parent=1 // pred_fallthru
      _
    // Predicated region
    $region58: #{tpu_custom_call.1} parent=1 // pred_check
      _
    $region59: #{tpu_custom_call.1} parent=1 // pred_check_branch
      %155 = sbr.rel (0) target = $region61
    $region60: #{tpu_custom_call.1} parent=1 // pred_region
      %156 = dma.done [#allocation3], 2048
    $region61: #{tpu_custom_call.1} parent=1 // pred_fallthru
      _
    // Predicated region
    $region62: #{tpu_custom_call.1} parent=1 // pred_check
      _
    $region63: #{tpu_custom_call.1} parent=1 // pred_check_branch
      %158 = sbr.rel (0) target = $region65
    $region64: #{tpu_custom_call.1} parent=1 // pred_region
      %159 = dma.done [#allocation6], 512
    $region65: #{tpu_custom_call.1} parent=1 // pred_fallthru
      _
    // Predicated region
    $region66: #{tpu_custom_call.1} parent=1 // pred_check
      _
    $region67: #{tpu_custom_call.1} parent=1 // pred_check_branch
      %161 = sbr.rel (0) target = $region69
    $region68: #{tpu_custom_call.1} parent=1 // pred_region
      %162 = dma.done [#allocation6], 512
    $region69: #{tpu_custom_call.1} parent=1 // pred_fallthru
      _
    // Predicated region
    $region70: #{tpu_custom_call.1} parent=1 // pred_check
      _
    $region71: #{tpu_custom_call.1} parent=1 // pred_check_branch
      %164 = sbr.rel (0) target = $region73
    $region72: #{tpu_custom_call.1} parent=1 // pred_region
      %165 = dma.done [#allocation9], 2048
    $region73: #{tpu_custom_call.1} parent=1 // pred_fallthru
      _
    // Predicated region
    $region74: #{tpu_custom_call.1} parent=1 // pred_check
      _
    $region75: #{tpu_custom_call.1} parent=1 // pred_check_branch
      %167 = sbr.rel (0) target = $region77
    $region76: #{tpu_custom_call.1} parent=1 // pred_region
      %168 = dma.done [#allocation9], 2048
    $region77: #{tpu_custom_call.1} parent=1 // pred_fallthru
      _
    // Predicated region
    $region78: #{tpu_custom_call.1} parent=1 // pred_check
      _
    $region79: #{tpu_custom_call.1} parent=1 // pred_check_branch
      %170 = sbr.rel (0) target = $region81
    $region80: #{tpu_custom_call.1} parent=1 // pred_region
      %171 = dma.done [#allocation12], 512
    $region81: #{tpu_custom_call.1} parent=1 // pred_fallthru
      _
    // Predicated region
    $region82: #{tpu_custom_call.1} parent=1 // pred_check
      _
    $region83: #{tpu_custom_call.1} parent=1 // pred_check_branch
      %173 = sbr.rel (0) target = $region85
    $region84: #{tpu_custom_call.1} parent=1 // pred_region
      %174 = dma.done [#allocation12], 1024
    $region85: #{tpu_custom_call.1} parent=1 // pred_fallthru
      _
    // Predicated region
    $region86: #{tpu_custom_call.1} parent=1 // pred_check
      _
    $region87: #{tpu_custom_call.1} parent=1 // pred_check_branch
      %176 = sbr.rel (0) target = $region89
    $region88: #{tpu_custom_call.1} parent=1 // pred_region
      %177 = dma.done [#allocation15], 4096
    $region89: #{tpu_custom_call.1} parent=1 // pred_fallthru
      _
    // Predicated region
    $region90: #{tpu_custom_call.1} parent=1 // pred_check
      _
    $region91: #{tpu_custom_call.1} parent=1 // pred_check_branch
      %179 = sbr.rel (0) target = $region93
    $region92: #{tpu_custom_call.1} parent=1 // pred_region
      %180 = dma.done [#allocation15], 2048
    $region93: #{tpu_custom_call.1} parent=1 // pred_fallthru
      _
    // Predicated region
    $region94: #{tpu_custom_call.1} parent=1 // pred_check
      _
    $region95: #{tpu_custom_call.1} parent=1 // pred_check_branch
      %182 = sbr.rel (0) target = $region97
    $region96: #{tpu_custom_call.1} parent=1 // pred_region
      %183 = dma.done [#allocation18], 2048
    $region97: #{tpu_custom_call.1} parent=1 // pred_fallthru
      _
    %v185 = vld [vmem:[%s0] sm:$0xff]
    %v186 = vld [vmem:[%s0 + $0x8] sm:$0xff]
    %v187 = vld [vmem:[%s0 + $0x10] sm:$0xff]
    %v188 = vld [vmem:[%s0 + $0x18] sm:$0xff]
    %v189 = vld [vmem:[%s0 + $0x20] sm:$0xff]
    %v190 = vld [vmem:[%s0 + $0x28] sm:$0xff]
    %v191 = vld [vmem:[%s0 + $0x30] sm:$0xff]
    %v192 = vld [vmem:[%s0 + $0x38] sm:$0xff]
    %v193 = vld [vmem:[%s11] sm:$0x1]
    %v194 = vld [vmem:[%s11 + $0x1] sm:$0x1]
    %v195 = vld [vmem:[%s11 + $0x2] sm:$0x1]
    %v196 = vld [vmem:[%s11 + $0x3] sm:$0x1]
    %v197 = vld [vmem:[%s11 + $0x4] sm:$0x1]
    %v198 = vld [vmem:[%s11 + $0x5] sm:$0x1]
    %v199 = vld [vmem:[%s11 + $0x6] sm:$0x1]
    %v200 = vld [vmem:[%s11 + $0x7] sm:$0x1]
    %v201 = vld [vmem:[%s11 + $0x8] sm:$0x1]
    %v202 = vld [vmem:[%s11 + $0x9] sm:$0x1]
    %v203 = vld [vmem:[%s12] ss:$2 sm:$0x3]
    %s204 = scalar_lea.vmem %s12, 1
    %v205 = vld [vmem:[%s204] ss:$2 sm:$0x3]
    %v206 = vmul.f32 %v185, %v185
    %v207 = vmul.f32 %v186, %v186
    %v208 = vmul.f32 %v187, %v187
    %v209 = vmul.f32 %v188, %v188
    %v210 = vmul.f32 %v189, %v189
    %v211 = vmul.f32 %v190, %v190
    %v212 = vmul.f32 %v191, %v191
    %v213 = vmul.f32 %v192, %v192
    %214 = vadd.xlane.f32.xlu0 %v206
    %v215 = vpop.xlane.xlu0 %214
    %216 = vadd.xlane.f32.xlu0 %v207
    %v217 = vpop.xlane.xlu0 %216
    %218 = vadd.xlane.f32.xlu0 %v208
    %v219 = vpop.xlane.xlu0 %218
    %220 = vadd.xlane.f32.xlu0 %v209
    %v221 = vpop.xlane.xlu0 %220
    %222 = vadd.xlane.f32.xlu0 %v210
    %v223 = vpop.xlane.xlu0 %222
    %224 = vadd.xlane.f32.xlu0 %v211
    %v225 = vpop.xlane.xlu0 %224
    %226 = vadd.xlane.f32.xlu0 %v212
    %v227 = vpop.xlane.xlu0 %226
    %228 = vadd.xlane.f32.xlu0 %v213
    %v229 = vpop.xlane.xlu0 %228
    %v230 = vrcp.pop 128.0
    %v231 = vmul.f32 %v215, %v230
    %v232 = vmul.f32 %v217, %v230
    %v233 = vmul.f32 %v219, %v230
    %v234 = vmul.f32 %v221, %v230
    %v235 = vmul.f32 %v223, %v230
    %v236 = vmul.f32 %v225, %v230
    %v237 = vmul.f32 %v227, %v230
    %v238 = vmul.f32 %v229, %v230
    %v239 = vadd.f32 %v231, 1e-08
    %v240 = vadd.f32 %v232, 1e-08
    %v241 = vadd.f32 %v233, 1e-08
    %v242 = vadd.f32 %v234, 1e-08
    %v243 = vadd.f32 %v235, 1e-08
    %v244 = vadd.f32 %v236, 1e-08
    %v245 = vadd.f32 %v237, 1e-08
    %v246 = vadd.f32 %v238, 1e-08
    %v247 = vrsqrt.pop %v239
    %v248 = vrsqrt.pop %v240
    %v249 = vrsqrt.pop %v241
    %v250 = vrsqrt.pop %v242
    %v251 = vrsqrt.pop %v243
    %v252 = vrsqrt.pop %v244
    %v253 = vrsqrt.pop %v245
    %v254 = vrsqrt.pop %v246
    %v255 = vmul.f32 %v185, %v247
    %v256 = vmul.f32 %v186, %v248
    %v257 = vmul.f32 %v187, %v249
    %v258 = vmul.f32 %v188, %v250
    %v259 = vmul.f32 %v189, %v251
    %v260 = vmul.f32 %v190, %v252
    %v261 = vmul.f32 %v191, %v253
    %v262 = vmul.f32 %v192, %v254
    %v263 = vlaneseq
    %v264 = vshrl.u32 %v263, 7
    %v265 = vsub.s32 0, %v264
    %v266 = vrot.slane %v193, %v265
    %v267 = vmul.f32 %v255, %v266
    %v268 = vmul.f32 %v256, %v266
    %v269 = vmul.f32 %v257, %v266
    %v270 = vmul.f32 %v258, %v266
    %v271 = vmul.f32 %v259, %v266
    %v272 = vmul.f32 %v260, %v266
    %v273 = vmul.f32 %v261, %v266
    %v274 = vmul.f32 %v262, %v266
    %v275 = vpack.c.bf16 %v268, %v267
    %v276 = vpack.c.bf16 %v270, %v269
    %v277 = vpack.c.bf16 %v272, %v271
    %v278 = vpack.c.bf16 %v274, %v273
    %v279 = vld [vmem:[#allocation2] sm:$0xff]
    %v280 = vld [vmem:[#allocation2 + $0x8] sm:$0xff]
    %v281 = vld [vmem:[#allocation2 + $0x10] sm:$0xff]
    %v282 = vld [vmem:[#allocation2 + $0x18] sm:$0xff]
    %v283 = vld [vmem:[#allocation2 + $0x20] sm:$0xff]
    %v284 = vld [vmem:[#allocation2 + $0x28] sm:$0xff]
    %v285 = vld [vmem:[#allocation2 + $0x30] sm:$0xff]
    %v286 = vld [vmem:[#allocation2 + $0x38] sm:$0xff]
    %v287 = vld [vmem:[#allocation2 + $0x40] sm:$0xff]
    %v288 = vld [vmem:[#allocation2 + $0x48] sm:$0xff]
    %v289 = vld [vmem:[#allocation2 + $0x50] sm:$0xff]
    %v290 = vld [vmem:[#allocation2 + $0x58] sm:$0xff]
    %v291 = vld [vmem:[#allocation2 + $0x60] sm:$0xff]
    %v292 = vld [vmem:[#allocation2 + $0x68] sm:$0xff]
    %v293 = vld [vmem:[#allocation2 + $0x70] sm:$0xff]
    %v294 = vld [vmem:[#allocation2 + $0x78] sm:$0xff]
    %v311 = vunpack.c.l.b16 %v279
    %v312 = vunpack.c.h.b16 %v279
    %v313 = vunpack.c.l.b16 %v280
    %v314 = vunpack.c.h.b16 %v280
    %v315 = vunpack.c.l.b16 %v281
    %v316 = vunpack.c.h.b16 %v281
    %v317 = vunpack.c.l.b16 %v282
    %v318 = vunpack.c.h.b16 %v282
    %v319 = vunpack.c.l.b16 %v283
    %v320 = vunpack.c.h.b16 %v283
    %v321 = vunpack.c.l.b16 %v284
    %v322 = vunpack.c.h.b16 %v284
    %v323 = vunpack.c.l.b16 %v285
    %v324 = vunpack.c.h.b16 %v285
    %v325 = vunpack.c.l.b16 %v286
    %v326 = vunpack.c.h.b16 %v286
    %v327 = vunpack.c.l.b16 %v287
    %v328 = vunpack.c.h.b16 %v287
    %v329 = vunpack.c.l.b16 %v288
    %v330 = vunpack.c.h.b16 %v288
    %v331 = vunpack.c.l.b16 %v289
    %v332 = vunpack.c.h.b16 %v289
    %v333 = vunpack.c.l.b16 %v290
    %v334 = vunpack.c.h.b16 %v290
    %v335 = vunpack.c.l.b16 %v291
    %v336 = vunpack.c.h.b16 %v291
    %v337 = vunpack.c.l.b16 %v292
    %v338 = vunpack.c.h.b16 %v292
    %v339 = vunpack.c.l.b16 %v293
    %v340 = vunpack.c.h.b16 %v293
    %v341 = vunpack.c.l.b16 %v294
    %v342 = vunpack.c.h.b16 %v294
    %v343 = vpack.c.b16 %v313, %v311
    %v344 = vpack.c.b16 %v314, %v312
    %v345 = vpack.c.b16 %v317, %v315
    %v346 = vpack.c.b16 %v318, %v316
    %v347 = vpack.c.b16 %v321, %v319
    %v348 = vpack.c.b16 %v322, %v320
    %v349 = vpack.c.b16 %v325, %v323
    %v350 = vpack.c.b16 %v326, %v324
    %v351 = vpack.c.b16 %v329, %v327
    %v352 = vpack.c.b16 %v330, %v328
    %v353 = vpack.c.b16 %v333, %v331
    %v354 = vpack.c.b16 %v334, %v332
    %v355 = vpack.c.b16 %v337, %v335
    %v356 = vpack.c.b16 %v338, %v336
    %v357 = vpack.c.b16 %v341, %v339
    %v358 = vpack.c.b16 %v342, %v340
    %375 = vmatprep.subr.bf16.mxu0 %v344
    %376 = vmatpush1.bf16.msra.mxu0 %v343
    %377 = vmatprep.subr.bf16.mxu0 %v346
    %378 = vmatpush1.bf16.msra.mxu0 %v345
    %379 = vmatprep.subr.bf16.mxu0 %v348
    %380 = vmatpush1.bf16.msra.mxu0 %v347
    %381 = vmatprep.subr.bf16.mxu0 %v350
    %382 = vmatpush1.bf16.msra.mxu0 %v349
    %383 = vmatprep.subr.bf16.mxu0 %v352
    %384 = vmatpush1.bf16.msra.mxu0 %v351
    %385 = vmatprep.subr.bf16.mxu0 %v354
    %386 = vmatpush1.bf16.msra.mxu0 %v353
    %387 = vmatprep.subr.bf16.mxu0 %v356
    %388 = vmatpush1.bf16.msra.mxu0 %v355
    %389 = vmatprep.subr.bf16.mxu0 %v358
    %390 = vmatpush1.bf16.msra.mxu0 %v357
    %391 = vmatprep.subr.bf16.mxu0 0
    %392 = vmatpush1.bf16.msra.mxu0 0
    %393 = vmatprep.subr.bf16.mxu0 0
    %394 = vmatpush1.bf16.msra.mxu0 0
    %395 = vmatprep.subr.bf16.mxu0 0
    %396 = vmatpush1.bf16.msra.mxu0 0
    %397 = vmatprep.subr.bf16.mxu0 0
    %398 = vmatpush1.bf16.msra.mxu0 0
    %399 = vmatprep.subr.bf16.mxu0 0
    %400 = vmatpush1.bf16.msra.mxu0 0
    %401 = vmatprep.subr.bf16.mxu0 0
    %402 = vmatpush1.bf16.msra.mxu0 0
    %403 = vmatprep.subr.bf16.mxu0 0
    %404 = vmatpush1.bf16.msra.mxu0 0
    %405 = vmatprep.subr.bf16.mxu0 0
    %406 = vmatpush1.bf16.msra.mxu0 0
    %407 = vmatprep.mubr.bf16.mxu0 0
    %408 = vmatmul.mubr.bf16.gmra.mrb[0].mxu0 %v275
    %v409 = vpop.f32.mrb[0].mxu0
    %v410 = vadd.f32 0.0, %v409
    %v411 = vpop.f32.mrb[0].mxu0
    %v412 = vadd.f32 0.0, %v411
    %v413 = vpop.f32.mrb[0].mxu0
    %v414 = vadd.f32 0.0, %v413
    %v415 = vpop.f32.mrb[0].mxu0
    %v416 = vadd.f32 0.0, %v415
    %417 = vmatprep.mubr.bf16.mxu0 0
    %418 = vmatmul.mubr.bf16.gmra.mrb[0].mxu0 %v276
    %v419 = vpop.f32.mrb[0].mxu0
    %v420 = vadd.f32 0.0, %v419
    %v421 = vpop.f32.mrb[0].mxu0
    %v422 = vadd.f32 0.0, %v421
    %v423 = vpop.f32.mrb[0].mxu0
    %v424 = vadd.f32 0.0, %v423
    %v425 = vpop.f32.mrb[0].mxu0
    %v426 = vadd.f32 0.0, %v425
    %427 = vmatprep.mubr.bf16.mxu0 0
    %428 = vmatmul.mubr.bf16.gmra.mrb[0].mxu0 %v277
    %v429 = vpop.f32.mrb[0].mxu0
    %v430 = vadd.f32 0.0, %v429
    %v431 = vpop.f32.mrb[0].mxu0
    %v432 = vadd.f32 0.0, %v431
    %v433 = vpop.f32.mrb[0].mxu0
    %v434 = vadd.f32 0.0, %v433
    %v435 = vpop.f32.mrb[0].mxu0
    %v436 = vadd.f32 0.0, %v435
    %437 = vmatprep.mubr.bf16.mxu0 0
    %438 = vmatmul.mubr.bf16.gmra.mrb[0].mxu0 %v278
    %v439 = vpop.f32.mrb[0].mxu0
    %v440 = vadd.f32 0.0, %v439
    %v441 = vpop.f32.mrb[0].mxu0
    %v442 = vadd.f32 0.0, %v441
    %v443 = vpop.f32.mrb[0].mxu0
    %v444 = vadd.f32 0.0, %v443
    %v445 = vpop.f32.mrb[0].mxu0
    %v446 = vadd.f32 0.0, %v445
    %447 = vdwg.mxu0
    %v448 = vlaneseq
    %v449 = vshrl.u32 %v448, 7
    %v450 = vsub.s32 0, %v449
    %v451 = vrot.slane %v194, %v450
    %v452 = vadd.f32 %v410, %v451
    %v453 = vadd.f32 %v414, %v451
    %v454 = vadd.f32 %v420, %v451
    %v455 = vadd.f32 %v424, %v451
    %v456 = vadd.f32 %v430, %v451
    %v457 = vadd.f32 %v434, %v451
    %v458 = vadd.f32 %v440, %v451
    %v459 = vadd.f32 %v444, %v451
    %v460 = vlaneseq
    %v461 = vshrl.u32 %v460, 7
    %v462 = vsub.s32 0, %v461
    %v463 = vrot.slane %v195, %v462
    %v464 = vadd.f32 %v412, %v463
    %v465 = vadd.f32 %v416, %v463
    %v466 = vadd.f32 %v422, %v463
    %v467 = vadd.f32 %v426, %v463
    %v468 = vadd.f32 %v432, %v463
    %v469 = vadd.f32 %v436, %v463
    %v470 = vadd.f32 %v442, %v463
    %v471 = vadd.f32 %v446, %v463
    %v472 = vpack.c.bf16 %v453, %v452
    %v473 = vpack.c.bf16 %v455, %v454
    %v474 = vpack.c.bf16 %v457, %v456
    %v475 = vpack.c.bf16 %v459, %v458
    %v476 = vld [vmem:[#allocation5] sm:$0xf]
    %v477 = vld [vmem:[#allocation5 + $0x4] sm:$0xf]
    %v478 = vld [vmem:[#allocation5 + $0x8] sm:$0xf]
    %v479 = vld [vmem:[#allocation5 + $0xc] sm:$0xf]
    %v480 = vld [vmem:[#allocation5 + $0x10] sm:$0xf]
    %v481 = vld [vmem:[#allocation5 + $0x14] sm:$0xf]
    %v482 = vld [vmem:[#allocation5 + $0x18] sm:$0xf]
    %v483 = vld [vmem:[#allocation5 + $0x1c] sm:$0xf]
    %v492 = vunpack.c.l.b16 %v476
    %v493 = vunpack.c.l.b16 %v477
    %v494 = vunpack.c.l.b16 %v478
    %v495 = vunpack.c.l.b16 %v479
    %v496 = vunpack.c.l.b16 %v480
    %v497 = vunpack.c.l.b16 %v481
    %v498 = vunpack.c.l.b16 %v482
    %v499 = vunpack.c.l.b16 %v483
    %v500 = vpack.c.b16 %v493, %v492
    %v501 = vpack.c.b16 %v495, %v494
    %v502 = vpack.c.b16 %v497, %v496
    %v503 = vpack.c.b16 %v499, %v498
    %vm504 = vcmask 523264
    %v506 = vsel %vm504, %v500, 0
    %v509 = vsel %vm504, %v501, 0
    %v512 = vsel %vm504, %v502, 0
    %v515 = vsel %vm504, %v503, 0
    %517 = vmatprep.subr.bf16.mxu0 0
    %518 = vmatpush1.bf16.msra.mxu0 %v472
    %519 = vmatprep.subr.bf16.mxu0 0
    %520 = vmatpush1.bf16.msra.mxu0 %v473
    %521 = vmatprep.subr.bf16.mxu0 0
    %522 = vmatpush1.bf16.msra.mxu0 %v474
    %523 = vmatprep.subr.bf16.mxu0 0
    %524 = vmatpush1.bf16.msra.mxu0 %v475
    %525 = vmatprep.subr.bf16.mxu0 0
    %526 = vmatpush1.bf16.msra.mxu0 0
    %527 = vmatprep.subr.bf16.mxu0 0
    %528 = vmatpush1.bf16.msra.mxu0 0
    %529 = vmatprep.subr.bf16.mxu0 0
    %530 = vmatpush1.bf16.msra.mxu0 0
    %531 = vmatprep.subr.bf16.mxu0 0
    %532 = vmatpush1.bf16.msra.mxu0 0
    %533 = vmatprep.subr.bf16.mxu0 0
    %534 = vmatpush1.bf16.msra.mxu0 0
    %535 = vmatprep.subr.bf16.mxu0 0
    %536 = vmatpush1.bf16.msra.mxu0 0
    %537 = vmatprep.subr.bf16.mxu0 0
    %538 = vmatpush1.bf16.msra.mxu0 0
    %539 = vmatprep.subr.bf16.mxu0 0
    %540 = vmatpush1.bf16.msra.mxu0 0
    %541 = vmatprep.subr.bf16.mxu0 0
    %542 = vmatpush1.bf16.msra.mxu0 0
    %543 = vmatprep.subr.bf16.mxu0 0
    %544 = vmatpush1.bf16.msra.mxu0 0
    %545 = vmatprep.subr.bf16.mxu0 0
    %546 = vmatpush1.bf16.msra.mxu0 0
    %547 = vmatprep.subr.bf16.mxu0 0
    %548 = vmatpush1.bf16.msra.mxu0 0
    %549 = vmatprep.mubr.bf16.mxu0 0
    %550 = vmatmul.mubr.bf16.gmra.mrb[0].mxu0 %v506
    %v551 = vpop.f32.mrb[0].mxu0
    %v552 = vadd.f32 0.0, %v551
    %v553 = vpop.f32.mrb[0].mxu0
    %v554 = vpop.f32.mrb[0].mxu0
    %v555 = vadd.f32 0.0, %v554
    %v556 = vpop.f32.mrb[0].mxu0
    %557 = vmatprep.mubr.bf16.mxu0 0
    %558 = vmatmul.mubr.bf16.gmra.mrb[0].mxu0 %v509
    %v559 = vpop.f32.mrb[0].mxu0
    %v560 = vadd.f32 0.0, %v559
    %v561 = vpop.f32.mrb[0].mxu0
    %v562 = vpop.f32.mrb[0].mxu0
    %v563 = vadd.f32 0.0, %v562
    %v564 = vpop.f32.mrb[0].mxu0
    %565 = vmatprep.mubr.bf16.mxu0 0
    %566 = vmatmul.mubr.bf16.gmra.mrb[0].mxu0 %v512
    %v567 = vpop.f32.mrb[0].mxu0
    %v568 = vadd.f32 0.0, %v567
    %v569 = vpop.f32.mrb[0].mxu0
    %v570 = vpop.f32.mrb[0].mxu0
    %v571 = vadd.f32 0.0, %v570
    %v572 = vpop.f32.mrb[0].mxu0
    %573 = vmatprep.mubr.bf16.mxu0 0
    %574 = vmatmul.mubr.bf16.gmra.mrb[0].mxu0 %v515
    %v575 = vpop.f32.mrb[0].mxu0
    %v576 = vadd.f32 0.0, %v575
    %v577 = vpop.f32.mrb[0].mxu0
    %v578 = vpop.f32.mrb[0].mxu0
    %v579 = vadd.f32 0.0, %v578
    %v580 = vpop.f32.mrb[0].mxu0
    %581 = vdwg.mxu0
    %v582 = vld [vmem:[#allocation7] sm:$0xf]
    %v583 = vld [vmem:[#allocation7 + $0x4] sm:$0xf]
    %v584 = vld [vmem:[#allocation7 + $0x8] sm:$0xf]
    %v585 = vld [vmem:[#allocation7 + $0xc] sm:$0xf]
    %v586 = vld [vmem:[#allocation7 + $0x10] sm:$0xf]
    %v587 = vld [vmem:[#allocation7 + $0x14] sm:$0xf]
    %v588 = vld [vmem:[#allocation7 + $0x18] sm:$0xf]
    %v589 = vld [vmem:[#allocation7 + $0x1c] sm:$0xf]
    %v598 = vunpack.c.l.b16 %v582
    %v599 = vunpack.c.l.b16 %v583
    %v600 = vunpack.c.l.b16 %v584
    %v601 = vunpack.c.l.b16 %v585
    %v602 = vunpack.c.l.b16 %v586
    %v603 = vunpack.c.l.b16 %v587
    %v604 = vunpack.c.l.b16 %v588
    %v605 = vunpack.c.l.b16 %v589
    %v606 = vpack.c.b16 %v599, %v598
    %v607 = vpack.c.b16 %v601, %v600
    %v608 = vpack.c.b16 %v603, %v602
    %v609 = vpack.c.b16 %v605, %v604
    %v611 = vsel %vm504, %v606, 0
    %v614 = vsel %vm504, %v607, 0
    %v617 = vsel %vm504, %v608, 0
    %v620 = vsel %vm504, %v609, 0
    %622 = vmatprep.subr.bf16.mxu0 0
    %623 = vmatpush1.bf16.msra.mxu0 %v472
    %624 = vmatprep.subr.bf16.mxu0 0
    %625 = vmatpush1.bf16.msra.mxu0 %v473
    %626 = vmatprep.subr.bf16.mxu0 0
    %627 = vmatpush1.bf16.msra.mxu0 %v474
    %628 = vmatprep.subr.bf16.mxu0 0
    %629 = vmatpush1.bf16.msra.mxu0 %v475
    %630 = vmatprep.subr.bf16.mxu0 0
    %631 = vmatpush1.bf16.msra.mxu0 0
    %632 = vmatprep.subr.bf16.mxu0 0
    %633 = vmatpush1.bf16.msra.mxu0 0
    %634 = vmatprep.subr.bf16.mxu0 0
    %635 = vmatpush1.bf16.msra.mxu0 0
    %636 = vmatprep.subr.bf16.mxu0 0
    %637 = vmatpush1.bf16.msra.mxu0 0
    %638 = vmatprep.subr.bf16.mxu0 0
    %639 = vmatpush1.bf16.msra.mxu0 0
    %640 = vmatprep.subr.bf16.mxu0 0
    %641 = vmatpush1.bf16.msra.mxu0 0
    %642 = vmatprep.subr.bf16.mxu0 0
    %643 = vmatpush1.bf16.msra.mxu0 0
    %644 = vmatprep.subr.bf16.mxu0 0
    %645 = vmatpush1.bf16.msra.mxu0 0
    %646 = vmatprep.subr.bf16.mxu0 0
    %647 = vmatpush1.bf16.msra.mxu0 0
    %648 = vmatprep.subr.bf16.mxu0 0
    %649 = vmatpush1.bf16.msra.mxu0 0
    %650 = vmatprep.subr.bf16.mxu0 0
    %651 = vmatpush1.bf16.msra.mxu0 0
    %652 = vmatprep.subr.bf16.mxu0 0
    %653 = vmatpush1.bf16.msra.mxu0 0
    %654 = vmatprep.mubr.bf16.mxu0 0
    %655 = vmatmul.mubr.bf16.gmra.mrb[0].mxu0 %v611
    %v656 = vpop.f32.mrb[0].mxu0
    %v657 = vadd.f32 0.0, %v656
    %v658 = vpop.f32.mrb[0].mxu0
    %v659 = vpop.f32.mrb[0].mxu0
    %v660 = vadd.f32 0.0, %v659
    %v661 = vpop.f32.mrb[0].mxu0
    %662 = vmatprep.mubr.bf16.mxu0 0
    %663 = vmatmul.mubr.bf16.gmra.mrb[0].mxu0 %v614
    %v664 = vpop.f32.mrb[0].mxu0
    %v665 = vadd.f32 0.0, %v664
    %v666 = vpop.f32.mrb[0].mxu0
    %v667 = vpop.f32.mrb[0].mxu0
    %v668 = vadd.f32 0.0, %v667
    %v669 = vpop.f32.mrb[0].mxu0
    %670 = vmatprep.mubr.bf16.mxu0 0
    %671 = vmatmul.mubr.bf16.gmra.mrb[0].mxu0 %v617
    %v672 = vpop.f32.mrb[0].mxu0
    %v673 = vadd.f32 0.0, %v672
    %v674 = vpop.f32.mrb[0].mxu0
    %v675 = vpop.f32.mrb[0].mxu0
    %v676 = vadd.f32 0.0, %v675
    %v677 = vpop.f32.mrb[0].mxu0
    %678 = vmatprep.mubr.bf16.mxu0 0
    %679 = vmatmul.mubr.bf16.gmra.mrb[0].mxu0 %v620
    %v680 = vpop.f32.mrb[0].mxu0
    %v681 = vadd.f32 0.0, %v680
    %v682 = vpop.f32.mrb[0].mxu0
    %v683 = vpop.f32.mrb[0].mxu0
    %v684 = vadd.f32 0.0, %v683
    %v685 = vpop.f32.mrb[0].mxu0
    %686 = vdwg.mxu0
    %v687 = vpack.c.bf16 %v555, %v552
    %v688 = vpack.c.bf16 %v660, %v657
    %v689 = vpack.c.bf16 %v563, %v560
    %v690 = vpack.c.bf16 %v668, %v665
    %v691 = vpack.c.bf16 %v571, %v568
    %v692 = vpack.c.bf16 %v676, %v673
    %v693 = vpack.c.bf16 %v579, %v576
    %v694 = vpack.c.bf16 %v684, %v681
    %v695 = vld [vmem:[#allocation8] sm:$0xf]
    %v696 = vld [vmem:[#allocation8 + $0x4] sm:$0xf]
    %v697 = vld [vmem:[#allocation8 + $0x8] sm:$0xf]
    %v698 = vld [vmem:[#allocation8 + $0xc] sm:$0xf]
    %v699 = vld [vmem:[#allocation8 + $0x10] sm:$0xf]
    %v700 = vld [vmem:[#allocation8 + $0x14] sm:$0xf]
    %v701 = vld [vmem:[#allocation8 + $0x18] sm:$0xf]
    %v702 = vld [vmem:[#allocation8 + $0x1c] sm:$0xf]
    %v703 = vld [vmem:[#allocation8 + $0x20] sm:$0xf]
    %v704 = vld [vmem:[#allocation8 + $0x24] sm:$0xf]
    %v705 = vld [vmem:[#allocation8 + $0x28] sm:$0xf]
    %v706 = vld [vmem:[#allocation8 + $0x2c] sm:$0xf]
    %v707 = vld [vmem:[#allocation8 + $0x30] sm:$0xf]
    %v708 = vld [vmem:[#allocation8 + $0x34] sm:$0xf]
    %v709 = vld [vmem:[#allocation8 + $0x38] sm:$0xf]
    %v710 = vld [vmem:[#allocation8 + $0x3c] sm:$0xf]
    %v711 = vld [vmem:[#allocation8 + $0x40] sm:$0xf]
    %v712 = vld [vmem:[#allocation8 + $0x44] sm:$0xf]
    %v713 = vld [vmem:[#allocation8 + $0x48] sm:$0xf]
    %v714 = vld [vmem:[#allocation8 + $0x4c] sm:$0xf]
    %v715 = vld [vmem:[#allocation8 + $0x50] sm:$0xf]
    %v716 = vld [vmem:[#allocation8 + $0x54] sm:$0xf]
    %v717 = vld [vmem:[#allocation8 + $0x58] sm:$0xf]
    %v718 = vld [vmem:[#allocation8 + $0x5c] sm:$0xf]
    %v719 = vld [vmem:[#allocation8 + $0x60] sm:$0xf]
    %v720 = vld [vmem:[#allocation8 + $0x64] sm:$0xf]
    %v721 = vld [vmem:[#allocation8 + $0x68] sm:$0xf]
    %v722 = vld [vmem:[#allocation8 + $0x6c] sm:$0xf]
    %v723 = vld [vmem:[#allocation8 + $0x70] sm:$0xf]
    %v724 = vld [vmem:[#allocation8 + $0x74] sm:$0xf]
    %v725 = vld [vmem:[#allocation8 + $0x78] sm:$0xf]
    %v726 = vld [vmem:[#allocation8 + $0x7c] sm:$0xf]
    %v759 = vunpack.c.l.b16 %v695
    %v760 = vunpack.c.l.b16 %v696
    %v761 = vunpack.c.l.b16 %v697
    %v762 = vunpack.c.l.b16 %v698
    %v763 = vunpack.c.l.b16 %v699
    %v764 = vunpack.c.l.b16 %v700
    %v765 = vunpack.c.l.b16 %v701
    %v766 = vunpack.c.l.b16 %v702
    %v767 = vunpack.c.l.b16 %v703
    %v768 = vunpack.c.l.b16 %v704
    %v769 = vunpack.c.l.b16 %v705
    %v770 = vunpack.c.l.b16 %v706
    %v771 = vunpack.c.l.b16 %v707
    %v772 = vunpack.c.l.b16 %v708
    %v773 = vunpack.c.l.b16 %v709
    %v774 = vunpack.c.l.b16 %v710
    %v775 = vunpack.c.l.b16 %v711
    %v776 = vunpack.c.l.b16 %v712
    %v777 = vunpack.c.l.b16 %v713
    %v778 = vunpack.c.l.b16 %v714
    %v779 = vunpack.c.l.b16 %v715
    %v780 = vunpack.c.l.b16 %v716
    %v781 = vunpack.c.l.b16 %v717
    %v782 = vunpack.c.l.b16 %v718
    %v783 = vunpack.c.l.b16 %v719
    %v784 = vunpack.c.l.b16 %v720
    %v785 = vunpack.c.l.b16 %v721
    %v786 = vunpack.c.l.b16 %v722
    %v787 = vunpack.c.l.b16 %v723
    %v788 = vunpack.c.l.b16 %v724
    %v789 = vunpack.c.l.b16 %v725
    %v790 = vunpack.c.l.b16 %v726
    %v791 = vpack.c.b16 %v760, %v759
    %v792 = vpack.c.b16 %v762, %v761
    %v793 = vpack.c.b16 %v764, %v763
    %v794 = vpack.c.b16 %v766, %v765
    %v795 = vpack.c.b16 %v768, %v767
    %v796 = vpack.c.b16 %v770, %v769
    %v797 = vpack.c.b16 %v772, %v771
    %v798 = vpack.c.b16 %v774, %v773
    %v799 = vpack.c.b16 %v776, %v775
    %v800 = vpack.c.b16 %v778, %v777
    %v801 = vpack.c.b16 %v780, %v779
    %v802 = vpack.c.b16 %v782, %v781
    %v803 = vpack.c.b16 %v784, %v783
    %v804 = vpack.c.b16 %v786, %v785
    %v805 = vpack.c.b16 %v788, %v787
    %v806 = vpack.c.b16 %v790, %v789
    %823 = vmatprep.subr.bf16.mxu0 0
    %824 = vmatpush1.bf16.msra.mxu0 %v791
    %825 = vmatprep.subr.bf16.mxu0 0
    %826 = vmatpush1.bf16.msra.mxu0 %v792
    %827 = vmatprep.subr.bf16.mxu0 0
    %828 = vmatpush1.bf16.msra.mxu0 %v793
    %829 = vmatprep.subr.bf16.mxu0 0
    %830 = vmatpush1.bf16.msra.mxu0 %v794
    %831 = vmatprep.subr.bf16.mxu0 0
    %832 = vmatpush1.bf16.msra.mxu0 %v795
    %833 = vmatprep.subr.bf16.mxu0 0
    %834 = vmatpush1.bf16.msra.mxu0 %v796
    %835 = vmatprep.subr.bf16.mxu0 0
    %836 = vmatpush1.bf16.msra.mxu0 %v797
    %837 = vmatprep.subr.bf16.mxu0 0
    %838 = vmatpush1.bf16.msra.mxu0 %v798
    %839 = vmatprep.subr.bf16.mxu0 0
    %840 = vmatpush1.bf16.msra.mxu0 %v799
    %841 = vmatprep.subr.bf16.mxu0 0
    %842 = vmatpush1.bf16.msra.mxu0 %v800
    %843 = vmatprep.subr.bf16.mxu0 0
    %844 = vmatpush1.bf16.msra.mxu0 %v801
    %845 = vmatprep.subr.bf16.mxu0 0
    %846 = vmatpush1.bf16.msra.mxu0 %v802
    %847 = vmatprep.subr.bf16.mxu0 0
    %848 = vmatpush1.bf16.msra.mxu0 %v803
    %849 = vmatprep.subr.bf16.mxu0 0
    %850 = vmatpush1.bf16.msra.mxu0 %v804
    %851 = vmatprep.subr.bf16.mxu0 0
    %852 = vmatpush1.bf16.msra.mxu0 %v805
    %853 = vmatprep.subr.bf16.mxu0 0
    %854 = vmatpush1.bf16.msra.mxu0 %v806
    %855 = vmatprep.mubr.bf16.mxu0 %v688
    %856 = vmatmul.mubr.bf16.gmra.mrb[0].mxu0 %v687
    %v857 = vpop.f32.mrb[0].mxu0
    %v858 = vadd.f32 0.0, %v857
    %v859 = vpop.f32.mrb[0].mxu0
    %v860 = vpop.f32.mrb[0].mxu0
    %v861 = vadd.f32 0.0, %v860
    %v862 = vpop.f32.mrb[0].mxu0
    %863 = vmatprep.mubr.bf16.mxu0 %v690
    %864 = vmatmul.mubr.bf16.gmra.mrb[0].mxu0 %v689
    %v865 = vpop.f32.mrb[0].mxu0
    %v866 = vadd.f32 0.0, %v865
    %v867 = vpop.f32.mrb[0].mxu0
    %v868 = vpop.f32.mrb[0].mxu0
    %v869 = vadd.f32 0.0, %v868
    %v870 = vpop.f32.mrb[0].mxu0
    %871 = vmatprep.mubr.bf16.mxu0 %v692
    %872 = vmatmul.mubr.bf16.gmra.mrb[0].mxu0 %v691
    %v873 = vpop.f32.mrb[0].mxu0
    %v874 = vadd.f32 0.0, %v873
    %v875 = vpop.f32.mrb[0].mxu0
    %v876 = vpop.f32.mrb[0].mxu0
    %v877 = vadd.f32 0.0, %v876
    %v878 = vpop.f32.mrb[0].mxu0
    %879 = vmatprep.mubr.bf16.mxu0 %v694
    %880 = vmatmul.mubr.bf16.gmra.mrb[0].mxu0 %v693
    %v881 = vpop.f32.mrb[0].mxu0
    %v882 = vadd.f32 0.0, %v881
    %v883 = vpop.f32.mrb[0].mxu0
    %v884 = vpop.f32.mrb[0].mxu0
    %v885 = vadd.f32 0.0, %v884
    %v886 = vpop.f32.mrb[0].mxu0
    %887 = vdwg.mxu0
    %v888 = vmul.f32 %v858, %v858
    %v889 = vmul.f32 %v861, %v861
    %v890 = vmul.f32 %v866, %v866
    %v891 = vmul.f32 %v869, %v869
    %v892 = vmul.f32 %v874, %v874
    %v893 = vmul.f32 %v877, %v877
    %v894 = vmul.f32 %v882, %v882
    %v895 = vmul.f32 %v885, %v885
    %v896 = vmul.f32 %v858, %v888
    %v897 = vmul.f32 %v861, %v889
    %v898 = vmul.f32 %v866, %v890
    %v899 = vmul.f32 %v869, %v891
    %v900 = vmul.f32 %v874, %v892
    %v901 = vmul.f32 %v877, %v893
    %v902 = vmul.f32 %v882, %v894
    %v903 = vmul.f32 %v885, %v895
    %v904 = vmul.f32 %v896, 0.044715
    %v905 = vmul.f32 %v897, 0.044715
    %v906 = vmul.f32 %v898, 0.044715
    %v907 = vmul.f32 %v899, 0.044715
    %v908 = vmul.f32 %v900, 0.044715
    %v909 = vmul.f32 %v901, 0.044715
    %v910 = vmul.f32 %v902, 0.044715
    %v911 = vmul.f32 %v903, 0.044715
    %v912 = vadd.f32 %v858, %v904
    %v913 = vadd.f32 %v861, %v905
    %v914 = vadd.f32 %v866, %v906
    %v915 = vadd.f32 %v869, %v907
    %v916 = vadd.f32 %v874, %v908
    %v917 = vadd.f32 %v877, %v909
    %v918 = vadd.f32 %v882, %v910
    %v919 = vadd.f32 %v885, %v911
    %v920 = vmul.f32 %v912, 0.7978846
    %v921 = vmul.f32 %v913, 0.7978846
    %v922 = vmul.f32 %v914, 0.7978846
    %v923 = vmul.f32 %v915, 0.7978846
    %v924 = vmul.f32 %v916, 0.7978846
    %v925 = vmul.f32 %v917, 0.7978846
    %v926 = vmul.f32 %v918, 0.7978846
    %v927 = vmul.f32 %v919, 0.7978846
    %v928 = vtanh.pop %v920
    %v929 = vtanh.pop %v921
    %v930 = vtanh.pop %v922
    %v931 = vtanh.pop %v923
    %v932 = vtanh.pop %v924
    %v933 = vtanh.pop %v925
    %v934 = vtanh.pop %v926
    %v935 = vtanh.pop %v927
    %v936 = vadd.f32 %v928, 1.0
    %v937 = vadd.f32 %v929, 1.0
    %v938 = vadd.f32 %v930, 1.0
    %v939 = vadd.f32 %v931, 1.0
    %v940 = vadd.f32 %v932, 1.0
    %v941 = vadd.f32 %v933, 1.0
    %v942 = vadd.f32 %v934, 1.0
    %v943 = vadd.f32 %v935, 1.0
    %v944 = vmul.f32 %v936, 0.5
    %v945 = vmul.f32 %v937, 0.5
    %v946 = vmul.f32 %v938, 0.5
    %v947 = vmul.f32 %v939, 0.5
    %v948 = vmul.f32 %v940, 0.5
    %v949 = vmul.f32 %v941, 0.5
    %v950 = vmul.f32 %v942, 0.5
    %v951 = vmul.f32 %v943, 0.5
    %v952 = vmul.f32 %v858, %v944
    %v953 = vmul.f32 %v861, %v945
    %v954 = vmul.f32 %v866, %v946
    %v955 = vmul.f32 %v869, %v947
    %v956 = vmul.f32 %v874, %v948
    %v957 = vmul.f32 %v877, %v949
    %v958 = vmul.f32 %v882, %v950
    %v959 = vmul.f32 %v885, %v951
    %v960 = vmul.f32 %v464, %v464
    %v961 = vmul.f32 %v465, %v465
    %v962 = vmul.f32 %v466, %v466
    %v963 = vmul.f32 %v467, %v467
    %v964 = vmul.f32 %v468, %v468
    %v965 = vmul.f32 %v469, %v469
    %v966 = vmul.f32 %v470, %v470
    %v967 = vmul.f32 %v471, %v471
    %968 = vadd.xlane.f32.xlu0 %v960
    %v969 = vpop.xlane.xlu0 %968
    %970 = vadd.xlane.f32.xlu0 %v961
    %v971 = vpop.xlane.xlu0 %970
    %972 = vadd.xlane.f32.xlu0 %v962
    %v973 = vpop.xlane.xlu0 %972
    %974 = vadd.xlane.f32.xlu0 %v963
    %v975 = vpop.xlane.xlu0 %974
    %976 = vadd.xlane.f32.xlu0 %v964
    %v977 = vpop.xlane.xlu0 %976
    %978 = vadd.xlane.f32.xlu0 %v965
    %v979 = vpop.xlane.xlu0 %978
    %980 = vadd.xlane.f32.xlu0 %v966
    %v981 = vpop.xlane.xlu0 %980
    %982 = vadd.xlane.f32.xlu0 %v967
    %v983 = vpop.xlane.xlu0 %982
    %v984 = vmul.f32 %v969, %v230
    %v985 = vmul.f32 %v971, %v230
    %v986 = vmul.f32 %v973, %v230
    %v987 = vmul.f32 %v975, %v230
    %v988 = vmul.f32 %v977, %v230
    %v989 = vmul.f32 %v979, %v230
    %v990 = vmul.f32 %v981, %v230
    %v991 = vmul.f32 %v983, %v230
    %v992 = vadd.f32 %v984, 1e-08
    %v993 = vadd.f32 %v985, 1e-08
    %v994 = vadd.f32 %v986, 1e-08
    %v995 = vadd.f32 %v987, 1e-08
    %v996 = vadd.f32 %v988, 1e-08
    %v997 = vadd.f32 %v989, 1e-08
    %v998 = vadd.f32 %v990, 1e-08
    %v999 = vadd.f32 %v991, 1e-08
    %v1000 = vrsqrt.pop %v992
    %v1001 = vrsqrt.pop %v993
    %v1002 = vrsqrt.pop %v994
    %v1003 = vrsqrt.pop %v995
    %v1004 = vrsqrt.pop %v996
    %v1005 = vrsqrt.pop %v997
    %v1006 = vrsqrt.pop %v998
    %v1007 = vrsqrt.pop %v999
    %v1008 = vmul.f32 %v464, %v1000
    %v1009 = vmul.f32 %v465, %v1001
    %v1010 = vmul.f32 %v466, %v1002
    %v1011 = vmul.f32 %v467, %v1003
    %v1012 = vmul.f32 %v468, %v1004
    %v1013 = vmul.f32 %v469, %v1005
    %v1014 = vmul.f32 %v470, %v1006
    %v1015 = vmul.f32 %v471, %v1007
    %v1016 = vlaneseq
    %v1017 = vshrl.u32 %v1016, 7
    %v1018 = vsub.s32 0, %v1017
    %v1019 = vrot.slane %v196, %v1018
    %v1020 = vmul.f32 %v1008, %v1019
    %v1021 = vmul.f32 %v1009, %v1019
    %v1022 = vmul.f32 %v1010, %v1019
    %v1023 = vmul.f32 %v1011, %v1019
    %v1024 = vmul.f32 %v1012, %v1019
    %v1025 = vmul.f32 %v1013, %v1019
    %v1026 = vmul.f32 %v1014, %v1019
    %v1027 = vmul.f32 %v1015, %v1019
    %v1028 = vpack.c.bf16 %v1021, %v1020
    %v1029 = vpack.c.bf16 %v1023, %v1022
    %v1030 = vpack.c.bf16 %v1025, %v1024
    %v1031 = vpack.c.bf16 %v1027, %v1026
    %v1032 = vld [vmem:[#allocation10] sm:$0xff]
    %v1033 = vld [vmem:[#allocation10 + $0x8] sm:$0xff]
    %v1034 = vld [vmem:[#allocation10 + $0x10] sm:$0xff]
    %v1035 = vld [vmem:[#allocation10 + $0x18] sm:$0xff]
    %v1036 = vld [vmem:[#allocation10 + $0x20] sm:$0xff]
    %v1037 = vld [vmem:[#allocation10 + $0x28] sm:$0xff]
    %v1038 = vld [vmem:[#allocation10 + $0x30] sm:$0xff]
    %v1039 = vld [vmem:[#allocation10 + $0x38] sm:$0xff]
    %v1040 = vld [vmem:[#allocation10 + $0x40] sm:$0xff]
    %v1041 = vld [vmem:[#allocation10 + $0x48] sm:$0xff]
    %v1042 = vld [vmem:[#allocation10 + $0x50] sm:$0xff]
    %v1043 = vld [vmem:[#allocation10 + $0x58] sm:$0xff]
    %v1044 = vld [vmem:[#allocation10 + $0x60] sm:$0xff]
    %v1045 = vld [vmem:[#allocation10 + $0x68] sm:$0xff]
    %v1046 = vld [vmem:[#allocation10 + $0x70] sm:$0xff]
    %v1047 = vld [vmem:[#allocation10 + $0x78] sm:$0xff]
    %v1064 = vunpack.c.l.b16 %v1032
    %v1065 = vunpack.c.h.b16 %v1032
    %v1066 = vunpack.c.l.b16 %v1033
    %v1067 = vunpack.c.h.b16 %v1033
    %v1068 = vunpack.c.l.b16 %v1034
    %v1069 = vunpack.c.h.b16 %v1034
    %v1070 = vunpack.c.l.b16 %v1035
    %v1071 = vunpack.c.h.b16 %v1035
    %v1072 = vunpack.c.l.b16 %v1036
    %v1073 = vunpack.c.h.b16 %v1036
    %v1074 = vunpack.c.l.b16 %v1037
    %v1075 = vunpack.c.h.b16 %v1037
    %v1076 = vunpack.c.l.b16 %v1038
    %v1077 = vunpack.c.h.b16 %v1038
    %v1078 = vunpack.c.l.b16 %v1039
    %v1079 = vunpack.c.h.b16 %v1039
    %v1080 = vunpack.c.l.b16 %v1040
    %v1081 = vunpack.c.h.b16 %v1040
    %v1082 = vunpack.c.l.b16 %v1041
    %v1083 = vunpack.c.h.b16 %v1041
    %v1084 = vunpack.c.l.b16 %v1042
    %v1085 = vunpack.c.h.b16 %v1042
    %v1086 = vunpack.c.l.b16 %v1043
    %v1087 = vunpack.c.h.b16 %v1043
    %v1088 = vunpack.c.l.b16 %v1044
    %v1089 = vunpack.c.h.b16 %v1044
    %v1090 = vunpack.c.l.b16 %v1045
    %v1091 = vunpack.c.h.b16 %v1045
    %v1092 = vunpack.c.l.b16 %v1046
    %v1093 = vunpack.c.h.b16 %v1046
    %v1094 = vunpack.c.l.b16 %v1047
    %v1095 = vunpack.c.h.b16 %v1047
    %v1096 = vpack.c.b16 %v1066, %v1064
    %v1097 = vpack.c.b16 %v1067, %v1065
    %v1098 = vpack.c.b16 %v1070, %v1068
    %v1099 = vpack.c.b16 %v1071, %v1069
    %v1100 = vpack.c.b16 %v1074, %v1072
    %v1101 = vpack.c.b16 %v1075, %v1073
    %v1102 = vpack.c.b16 %v1078, %v1076
    %v1103 = vpack.c.b16 %v1079, %v1077
    %v1104 = vpack.c.b16 %v1082, %v1080
    %v1105 = vpack.c.b16 %v1083, %v1081
    %v1106 = vpack.c.b16 %v1086, %v1084
    %v1107 = vpack.c.b16 %v1087, %v1085
    %v1108 = vpack.c.b16 %v1090, %v1088
    %v1109 = vpack.c.b16 %v1091, %v1089
    %v1110 = vpack.c.b16 %v1094, %v1092
    %v1111 = vpack.c.b16 %v1095, %v1093
    %1128 = vmatprep.subr.bf16.mxu0 %v1097
    %1129 = vmatpush1.bf16.msra.mxu0 %v1096
    %1130 = vmatprep.subr.bf16.mxu0 %v1099
    %1131 = vmatpush1.bf16.msra.mxu0 %v1098
    %1132 = vmatprep.subr.bf16.mxu0 %v1101
    %1133 = vmatpush1.bf16.msra.mxu0 %v1100
    %1134 = vmatprep.subr.bf16.mxu0 %v1103
    %1135 = vmatpush1.bf16.msra.mxu0 %v1102
    %1136 = vmatprep.subr.bf16.mxu0 %v1105
    %1137 = vmatpush1.bf16.msra.mxu0 %v1104
    %1138 = vmatprep.subr.bf16.mxu0 %v1107
    %1139 = vmatpush1.bf16.msra.mxu0 %v1106
    %1140 = vmatprep.subr.bf16.mxu0 %v1109
    %1141 = vmatpush1.bf16.msra.mxu0 %v1108
    %1142 = vmatprep.subr.bf16.mxu0 %v1111
    %1143 = vmatpush1.bf16.msra.mxu0 %v1110
    %1144 = vmatprep.subr.bf16.mxu0 0
    %1145 = vmatpush1.bf16.msra.mxu0 0
    %1146 = vmatprep.subr.bf16.mxu0 0
    %1147 = vmatpush1.bf16.msra.mxu0 0
    %1148 = vmatprep.subr.bf16.mxu0 0
    %1149 = vmatpush1.bf16.msra.mxu0 0
    %1150 = vmatprep.subr.bf16.mxu0 0
    %1151 = vmatpush1.bf16.msra.mxu0 0
    %1152 = vmatprep.subr.bf16.mxu0 0
    %1153 = vmatpush1.bf16.msra.mxu0 0
    %1154 = vmatprep.subr.bf16.mxu0 0
    %1155 = vmatpush1.bf16.msra.mxu0 0
    %1156 = vmatprep.subr.bf16.mxu0 0
    %1157 = vmatpush1.bf16.msra.mxu0 0
    %1158 = vmatprep.subr.bf16.mxu0 0
    %1159 = vmatpush1.bf16.msra.mxu0 0
    %1160 = vmatprep.mubr.bf16.mxu0 0
    %1161 = vmatmul.mubr.bf16.gmra.mrb[0].mxu0 %v1028
    %v1162 = vpop.f32.mrb[0].mxu0
    %v1163 = vadd.f32 0.0, %v1162
    %v1164 = vpop.f32.mrb[0].mxu0
    %v1165 = vadd.f32 0.0, %v1164
    %v1166 = vpop.f32.mrb[0].mxu0
    %v1167 = vadd.f32 0.0, %v1166
    %v1168 = vpop.f32.mrb[0].mxu0
    %v1169 = vadd.f32 0.0, %v1168
    %1170 = vmatprep.mubr.bf16.mxu0 0
    %1171 = vmatmul.mubr.bf16.gmra.mrb[0].mxu0 %v1029
    %v1172 = vpop.f32.mrb[0].mxu0
    %v1173 = vadd.f32 0.0, %v1172
    %v1174 = vpop.f32.mrb[0].mxu0
    %v1175 = vadd.f32 0.0, %v1174
    %v1176 = vpop.f32.mrb[0].mxu0
    %v1177 = vadd.f32 0.0, %v1176
    %v1178 = vpop.f32.mrb[0].mxu0
    %v1179 = vadd.f32 0.0, %v1178
    %1180 = vmatprep.mubr.bf16.mxu0 0
    %1181 = vmatmul.mubr.bf16.gmra.mrb[0].mxu0 %v1030
    %v1182 = vpop.f32.mrb[0].mxu0
    %v1183 = vadd.f32 0.0, %v1182
    %v1184 = vpop.f32.mrb[0].mxu0
    %v1185 = vadd.f32 0.0, %v1184
    %v1186 = vpop.f32.mrb[0].mxu0
    %v1187 = vadd.f32 0.0, %v1186
    %v1188 = vpop.f32.mrb[0].mxu0
    %v1189 = vadd.f32 0.0, %v1188
    %1190 = vmatprep.mubr.bf16.mxu0 0
    %1191 = vmatmul.mubr.bf16.gmra.mrb[0].mxu0 %v1031
    %v1192 = vpop.f32.mrb[0].mxu0
    %v1193 = vadd.f32 0.0, %v1192
    %v1194 = vpop.f32.mrb[0].mxu0
    %v1195 = vadd.f32 0.0, %v1194
    %v1196 = vpop.f32.mrb[0].mxu0
    %v1197 = vadd.f32 0.0, %v1196
    %v1198 = vpop.f32.mrb[0].mxu0
    %v1199 = vadd.f32 0.0, %v1198
    %1200 = vdwg.mxu0
    %v1201 = vlaneseq
    %v1202 = vshrl.u32 %v1201, 7
    %v1203 = vsub.s32 0, %v1202
    %v1204 = vrot.slane %v197, %v1203
    %v1205 = vadd.f32 %v1163, %v1204
    %v1206 = vadd.f32 %v1167, %v1204
    %v1207 = vadd.f32 %v1173, %v1204
    %v1208 = vadd.f32 %v1177, %v1204
    %v1209 = vadd.f32 %v1183, %v1204
    %v1210 = vadd.f32 %v1187, %v1204
    %v1211 = vadd.f32 %v1193, %v1204
    %v1212 = vadd.f32 %v1197, %v1204
    %v1213 = vmul.f32 %v1205, %v1205
    %v1214 = vmul.f32 %v1206, %v1206
    %v1215 = vmul.f32 %v1207, %v1207
    %v1216 = vmul.f32 %v1208, %v1208
    %v1217 = vmul.f32 %v1209, %v1209
    %v1218 = vmul.f32 %v1210, %v1210
    %v1219 = vmul.f32 %v1211, %v1211
    %v1220 = vmul.f32 %v1212, %v1212
    %v1221 = vmul.f32 %v1205, %v1213
    %v1222 = vmul.f32 %v1206, %v1214
    %v1223 = vmul.f32 %v1207, %v1215
    %v1224 = vmul.f32 %v1208, %v1216
    %v1225 = vmul.f32 %v1209, %v1217
    %v1226 = vmul.f32 %v1210, %v1218
    %v1227 = vmul.f32 %v1211, %v1219
    %v1228 = vmul.f32 %v1212, %v1220
    %v1229 = vmul.f32 %v1221, 0.044715
    %v1230 = vmul.f32 %v1222, 0.044715
    %v1231 = vmul.f32 %v1223, 0.044715
    %v1232 = vmul.f32 %v1224, 0.044715
    %v1233 = vmul.f32 %v1225, 0.044715
    %v1234 = vmul.f32 %v1226, 0.044715
    %v1235 = vmul.f32 %v1227, 0.044715
    %v1236 = vmul.f32 %v1228, 0.044715
    %v1237 = vadd.f32 %v1205, %v1229
    %v1238 = vadd.f32 %v1206, %v1230
    %v1239 = vadd.f32 %v1207, %v1231
    %v1240 = vadd.f32 %v1208, %v1232
    %v1241 = vadd.f32 %v1209, %v1233
    %v1242 = vadd.f32 %v1210, %v1234
    %v1243 = vadd.f32 %v1211, %v1235
    %v1244 = vadd.f32 %v1212, %v1236
    %v1245 = vmul.f32 %v1237, 0.7978846
    %v1246 = vmul.f32 %v1238, 0.7978846
    %v1247 = vmul.f32 %v1239, 0.7978846
    %v1248 = vmul.f32 %v1240, 0.7978846
    %v1249 = vmul.f32 %v1241, 0.7978846
    %v1250 = vmul.f32 %v1242, 0.7978846
    %v1251 = vmul.f32 %v1243, 0.7978846
    %v1252 = vmul.f32 %v1244, 0.7978846
    %v1253 = vtanh.pop %v1245
    %v1254 = vtanh.pop %v1246
    %v1255 = vtanh.pop %v1247
    %v1256 = vtanh.pop %v1248
    %v1257 = vtanh.pop %v1249
    %v1258 = vtanh.pop %v1250
    %v1259 = vtanh.pop %v1251
    %v1260 = vtanh.pop %v1252
    %v1261 = vadd.f32 %v1253, 1.0
    %v1262 = vadd.f32 %v1254, 1.0
    %v1263 = vadd.f32 %v1255, 1.0
    %v1264 = vadd.f32 %v1256, 1.0
    %v1265 = vadd.f32 %v1257, 1.0
    %v1266 = vadd.f32 %v1258, 1.0
    %v1267 = vadd.f32 %v1259, 1.0
    %v1268 = vadd.f32 %v1260, 1.0
    %v1269 = vmul.f32 %v1261, 0.5
    %v1270 = vmul.f32 %v1262, 0.5
    %v1271 = vmul.f32 %v1263, 0.5
    %v1272 = vmul.f32 %v1264, 0.5
    %v1273 = vmul.f32 %v1265, 0.5
    %v1274 = vmul.f32 %v1266, 0.5
    %v1275 = vmul.f32 %v1267, 0.5
    %v1276 = vmul.f32 %v1268, 0.5
    %v1277 = vmul.f32 %v1205, %v1269
    %v1278 = vmul.f32 %v1206, %v1270
    %v1279 = vmul.f32 %v1207, %v1271
    %v1280 = vmul.f32 %v1208, %v1272
    %v1281 = vmul.f32 %v1209, %v1273
    %v1282 = vmul.f32 %v1210, %v1274
    %v1283 = vmul.f32 %v1211, %v1275
    %v1284 = vmul.f32 %v1212, %v1276
    %v1285 = vlaneseq
    %v1286 = vshrl.u32 %v1285, 7
    %v1287 = vsub.s32 0, %v1286
    %v1288 = vrot.slane %v198, %v1287
    %v1289 = vadd.f32 %v1165, %v1288
    %v1290 = vadd.f32 %v1169, %v1288
    %v1291 = vadd.f32 %v1175, %v1288
    %v1292 = vadd.f32 %v1179, %v1288
    %v1293 = vadd.f32 %v1185, %v1288
    %v1294 = vadd.f32 %v1189, %v1288
    %v1295 = vadd.f32 %v1195, %v1288
    %v1296 = vadd.f32 %v1199, %v1288
    %v1297 = vmul.f32 %v1289, %v1289
    %v1298 = vmul.f32 %v1290, %v1290
    %v1299 = vmul.f32 %v1291, %v1291
    %v1300 = vmul.f32 %v1292, %v1292
    %v1301 = vmul.f32 %v1293, %v1293
    %v1302 = vmul.f32 %v1294, %v1294
    %v1303 = vmul.f32 %v1295, %v1295
    %v1304 = vmul.f32 %v1296, %v1296
    %v1305 = vmul.f32 %v1289, %v1297
    %v1306 = vmul.f32 %v1290, %v1298
    %v1307 = vmul.f32 %v1291, %v1299
    %v1308 = vmul.f32 %v1292, %v1300
    %v1309 = vmul.f32 %v1293, %v1301
    %v1310 = vmul.f32 %v1294, %v1302
    %v1311 = vmul.f32 %v1295, %v1303
    %v1312 = vmul.f32 %v1296, %v1304
    %v1313 = vmul.f32 %v1305, 0.044715
    %v1314 = vmul.f32 %v1306, 0.044715
    %v1315 = vmul.f32 %v1307, 0.044715
    %v1316 = vmul.f32 %v1308, 0.044715
    %v1317 = vmul.f32 %v1309, 0.044715
    %v1318 = vmul.f32 %v1310, 0.044715
    %v1319 = vmul.f32 %v1311, 0.044715
    %v1320 = vmul.f32 %v1312, 0.044715
    %v1321 = vadd.f32 %v1289, %v1313
    %v1322 = vadd.f32 %v1290, %v1314
    %v1323 = vadd.f32 %v1291, %v1315
    %v1324 = vadd.f32 %v1292, %v1316
    %v1325 = vadd.f32 %v1293, %v1317
    %v1326 = vadd.f32 %v1294, %v1318
    %v1327 = vadd.f32 %v1295, %v1319
    %v1328 = vadd.f32 %v1296, %v1320
    %v1329 = vmul.f32 %v1321, 0.7978846
    %v1330 = vmul.f32 %v1322, 0.7978846
    %v1331 = vmul.f32 %v1323, 0.7978846
    %v1332 = vmul.f32 %v1324, 0.7978846
    %v1333 = vmul.f32 %v1325, 0.7978846
    %v1334 = vmul.f32 %v1326, 0.7978846
    %v1335 = vmul.f32 %v1327, 0.7978846
    %v1336 = vmul.f32 %v1328, 0.7978846
    %v1337 = vtanh.pop %v1329
    %v1338 = vtanh.pop %v1330
    %v1339 = vtanh.pop %v1331
    %v1340 = vtanh.pop %v1332
    %v1341 = vtanh.pop %v1333
    %v1342 = vtanh.pop %v1334
    %v1343 = vtanh.pop %v1335
    %v1344 = vtanh.pop %v1336
    %v1345 = vadd.f32 %v1337, 1.0
    %v1346 = vadd.f32 %v1338, 1.0
    %v1347 = vadd.f32 %v1339, 1.0
    %v1348 = vadd.f32 %v1340, 1.0
    %v1349 = vadd.f32 %v1341, 1.0
    %v1350 = vadd.f32 %v1342, 1.0
    %v1351 = vadd.f32 %v1343, 1.0
    %v1352 = vadd.f32 %v1344, 1.0
    %v1353 = vmul.f32 %v1345, 0.5
    %v1354 = vmul.f32 %v1346, 0.5
    %v1355 = vmul.f32 %v1347, 0.5
    %v1356 = vmul.f32 %v1348, 0.5
    %v1357 = vmul.f32 %v1349, 0.5
    %v1358 = vmul.f32 %v1350, 0.5
    %v1359 = vmul.f32 %v1351, 0.5
    %v1360 = vmul.f32 %v1352, 0.5
    %v1361 = vmul.f32 %v1289, %v1353
    %v1362 = vmul.f32 %v1290, %v1354
    %v1363 = vmul.f32 %v1291, %v1355
    %v1364 = vmul.f32 %v1292, %v1356
    %v1365 = vmul.f32 %v1293, %v1357
    %v1366 = vmul.f32 %v1294, %v1358
    %v1367 = vmul.f32 %v1295, %v1359
    %v1368 = vmul.f32 %v1296, %v1360
    %v1369 = vmul.f32 %v1361, %v1361
    %v1370 = vmul.f32 %v1362, %v1362
    %v1371 = vmul.f32 %v1363, %v1363
    %v1372 = vmul.f32 %v1364, %v1364
    %v1373 = vmul.f32 %v1365, %v1365
    %v1374 = vmul.f32 %v1366, %v1366
    %v1375 = vmul.f32 %v1367, %v1367
    %v1376 = vmul.f32 %v1368, %v1368
    %1377 = vadd.xlane.f32.xlu0 %v1369
    %v1378 = vpop.xlane.xlu0 %1377
    %1379 = vadd.xlane.f32.xlu0 %v1370
    %v1380 = vpop.xlane.xlu0 %1379
    %1381 = vadd.xlane.f32.xlu0 %v1371
    %v1382 = vpop.xlane.xlu0 %1381
    %1383 = vadd.xlane.f32.xlu0 %v1372
    %v1384 = vpop.xlane.xlu0 %1383
    %1385 = vadd.xlane.f32.xlu0 %v1373
    %v1386 = vpop.xlane.xlu0 %1385
    %1387 = vadd.xlane.f32.xlu0 %v1374
    %v1388 = vpop.xlane.xlu0 %1387
    %1389 = vadd.xlane.f32.xlu0 %v1375
    %v1390 = vpop.xlane.xlu0 %1389
    %1391 = vadd.xlane.f32.xlu0 %v1376
    %v1392 = vpop.xlane.xlu0 %1391
    %v1393 = vmul.f32 %v1378, %v230
    %v1394 = vmul.f32 %v1380, %v230
    %v1395 = vmul.f32 %v1382, %v230
    %v1396 = vmul.f32 %v1384, %v230
    %v1397 = vmul.f32 %v1386, %v230
    %v1398 = vmul.f32 %v1388, %v230
    %v1399 = vmul.f32 %v1390, %v230
    %v1400 = vmul.f32 %v1392, %v230
    %v1401 = vadd.f32 %v1393, 1e-08
    %v1402 = vadd.f32 %v1394, 1e-08
    %v1403 = vadd.f32 %v1395, 1e-08
    %v1404 = vadd.f32 %v1396, 1e-08
    %v1405 = vadd.f32 %v1397, 1e-08
    %v1406 = vadd.f32 %v1398, 1e-08
    %v1407 = vadd.f32 %v1399, 1e-08
    %v1408 = vadd.f32 %v1400, 1e-08
    %v1409 = vrsqrt.pop %v1401
    %v1410 = vrsqrt.pop %v1402
    %v1411 = vrsqrt.pop %v1403
    %v1412 = vrsqrt.pop %v1404
    %v1413 = vrsqrt.pop %v1405
    %v1414 = vrsqrt.pop %v1406
    %v1415 = vrsqrt.pop %v1407
    %v1416 = vrsqrt.pop %v1408
    %v1417 = vmul.f32 %v1361, %v1409
    %v1418 = vmul.f32 %v1362, %v1410
    %v1419 = vmul.f32 %v1363, %v1411
    %v1420 = vmul.f32 %v1364, %v1412
    %v1421 = vmul.f32 %v1365, %v1413
    %v1422 = vmul.f32 %v1366, %v1414
    %v1423 = vmul.f32 %v1367, %v1415
    %v1424 = vmul.f32 %v1368, %v1416
    %v1425 = vlaneseq
    %v1426 = vshrl.u32 %v1425, 7
    %v1427 = vsub.s32 0, %v1426
    %v1428 = vrot.slane %v199, %v1427
    %v1429 = vmul.f32 %v1417, %v1428
    %v1430 = vmul.f32 %v1418, %v1428
    %v1431 = vmul.f32 %v1419, %v1428
    %v1432 = vmul.f32 %v1420, %v1428
    %v1433 = vmul.f32 %v1421, %v1428
    %v1434 = vmul.f32 %v1422, %v1428
    %v1435 = vmul.f32 %v1423, %v1428
    %v1436 = vmul.f32 %v1424, %v1428
    %v1437 = vld [vmem:[#allocation11] sm:$0xf]
    %v1438 = vld [vmem:[#allocation11 + $0x4] sm:$0xf]
    %v1439 = vld [vmem:[#allocation11 + $0x8] sm:$0xf]
    %v1440 = vld [vmem:[#allocation11 + $0xc] sm:$0xf]
    %v1441 = vld [vmem:[#allocation11 + $0x10] sm:$0xf]
    %v1442 = vld [vmem:[#allocation11 + $0x14] sm:$0xf]
    %v1443 = vld [vmem:[#allocation11 + $0x18] sm:$0xf]
    %v1444 = vld [vmem:[#allocation11 + $0x1c] sm:$0xf]
    %v1445 = vpack.c.bf16 %v1430, %v1429
    %v1446 = vpack.c.bf16 %v1432, %v1431
    %v1447 = vpack.c.bf16 %v1434, %v1433
    %v1448 = vpack.c.bf16 %v1436, %v1435
    %v1449 = vld [vmem:[%s13] sm:$0xff]
    %v1450 = vld [vmem:[%s13 + $0x8] sm:$0xff]
    %v1451 = vld [vmem:[%s13 + $0x10] sm:$0xff]
    %v1452 = vld [vmem:[%s13 + $0x18] sm:$0xff]
    %v1453 = vld [vmem:[%s13 + $0x20] sm:$0xff]
    %v1454 = vld [vmem:[%s13 + $0x28] sm:$0xff]
    %v1455 = vld [vmem:[%s13 + $0x30] sm:$0xff]
    %v1456 = vld [vmem:[%s13 + $0x38] sm:$0xff]
    %1458 = vset.pattern.permute.xlu0 0
    %1459 = vperm.xlu0 %1458, %v1449
    %v1460 = vpop.permute.xlu0 %1459
    %1463 = vset.pattern.permute.xlu0 0
    %1464 = vperm.xlu0 %1463, %v1450
    %v1465 = vpop.permute.xlu0 %1464
    %1468 = vset.pattern.permute.xlu0 0
    %1469 = vperm.xlu0 %1468, %v1451
    %v1470 = vpop.permute.xlu0 %1469
    %1473 = vset.pattern.permute.xlu0 0
    %1474 = vperm.xlu0 %1473, %v1452
    %v1475 = vpop.permute.xlu0 %1474
    %1478 = vset.pattern.permute.xlu0 0
    %1479 = vperm.xlu0 %1478, %v1453
    %v1480 = vpop.permute.xlu0 %1479
    %1483 = vset.pattern.permute.xlu0 0
    %1484 = vperm.xlu0 %1483, %v1454
    %v1485 = vpop.permute.xlu0 %1484
    %1488 = vset.pattern.permute.xlu0 0
    %1489 = vperm.xlu0 %1488, %v1455
    %v1490 = vpop.permute.xlu0 %1489
    %1493 = vset.pattern.permute.xlu0 0
    %1494 = vperm.xlu0 %1493, %v1456
    %v1495 = vpop.permute.xlu0 %1494
    %v1505 = vunpack.c.l.b16 %v1437
    %v1506 = vunpack.c.l.b16 %v1438
    %v1507 = vunpack.c.l.b16 %v1439
    %v1508 = vunpack.c.l.b16 %v1440
    %v1509 = vunpack.c.l.b16 %v1441
    %v1510 = vunpack.c.l.b16 %v1442
    %v1511 = vunpack.c.l.b16 %v1443
    %v1512 = vunpack.c.l.b16 %v1444
    %v1513 = vpack.c.b16 %v1506, %v1505
    %v1514 = vpack.c.b16 %v1508, %v1507
    %v1515 = vpack.c.b16 %v1510, %v1509
    %v1516 = vpack.c.b16 %v1512, %v1511
    %v1518 = vsel %vm504, %v1513, 0
    %v1521 = vsel %vm504, %v1514, 0
    %v1524 = vsel %vm504, %v1515, 0
    %v1527 = vsel %vm504, %v1516, 0
    %1529 = vmatprep.subr.bf16.mxu0 0
    %1530 = vmatpush1.bf16.msra.mxu0 %v1445
    %1531 = vmatprep.subr.bf16.mxu0 0
    %1532 = vmatpush1.bf16.msra.mxu0 %v1446
    %1533 = vmatprep.subr.bf16.mxu0 0
    %1534 = vmatpush1.bf16.msra.mxu0 %v1447
    %1535 = vmatprep.subr.bf16.mxu0 0
    %1536 = vmatpush1.bf16.msra.mxu0 %v1448
    %1537 = vmatprep.subr.bf16.mxu0 0
    %1538 = vmatpush1.bf16.msra.mxu0 0
    %1539 = vmatprep.subr.bf16.mxu0 0
    %1540 = vmatpush1.bf16.msra.mxu0 0
    %1541 = vmatprep.subr.bf16.mxu0 0
    %1542 = vmatpush1.bf16.msra.mxu0 0
    %1543 = vmatprep.subr.bf16.mxu0 0
    %1544 = vmatpush1.bf16.msra.mxu0 0
    %1545 = vmatprep.subr.bf16.mxu0 0
    %1546 = vmatpush1.bf16.msra.mxu0 0
    %1547 = vmatprep.subr.bf16.mxu0 0
    %1548 = vmatpush1.bf16.msra.mxu0 0
    %1549 = vmatprep.subr.bf16.mxu0 0
    %1550 = vmatpush1.bf16.msra.mxu0 0
    %1551 = vmatprep.subr.bf16.mxu0 0
    %1552 = vmatpush1.bf16.msra.mxu0 0
    %1553 = vmatprep.subr.bf16.mxu0 0
    %1554 = vmatpush1.bf16.msra.mxu0 0
    %1555 = vmatprep.subr.bf16.mxu0 0
    %1556 = vmatpush1.bf16.msra.mxu0 0
    %1557 = vmatprep.subr.bf16.mxu0 0
    %1558 = vmatpush1.bf16.msra.mxu0 0
    %1559 = vmatprep.subr.bf16.mxu0 0
    %1560 = vmatpush1.bf16.msra.mxu0 0
    %1561 = vmatprep.mubr.bf16.mxu0 0
    %1562 = vmatmul.mubr.bf16.gmra.mrb[0].mxu0 %v1518
    %v1563 = vpop.f32.mrb[0].mxu0
    %v1564 = vadd.f32 %v1460, %v1563
    %v1565 = vpop.f32.mrb[0].mxu0
    %v1566 = vpop.f32.mrb[0].mxu0
    %v1567 = vadd.f32 %v1465, %v1566
    %v1568 = vpop.f32.mrb[0].mxu0
    %1569 = vmatprep.mubr.bf16.mxu0 0
    %1570 = vmatmul.mubr.bf16.gmra.mrb[0].mxu0 %v1521
    %v1571 = vpop.f32.mrb[0].mxu0
    %v1572 = vadd.f32 %v1470, %v1571
    %v1573 = vpop.f32.mrb[0].mxu0
    %v1574 = vpop.f32.mrb[0].mxu0
    %v1575 = vadd.f32 %v1475, %v1574
    %v1576 = vpop.f32.mrb[0].mxu0
    %1577 = vmatprep.mubr.bf16.mxu0 0
    %1578 = vmatmul.mubr.bf16.gmra.mrb[0].mxu0 %v1524
    %v1579 = vpop.f32.mrb[0].mxu0
    %v1580 = vadd.f32 %v1480, %v1579
    %v1581 = vpop.f32.mrb[0].mxu0
    %v1582 = vpop.f32.mrb[0].mxu0
    %v1583 = vadd.f32 %v1485, %v1582
    %v1584 = vpop.f32.mrb[0].mxu0
    %1585 = vmatprep.mubr.bf16.mxu0 0
    %1586 = vmatmul.mubr.bf16.gmra.mrb[0].mxu0 %v1527
    %v1587 = vpop.f32.mrb[0].mxu0
    %v1588 = vadd.f32 %v1490, %v1587
    %v1589 = vpop.f32.mrb[0].mxu0
    %v1590 = vpop.f32.mrb[0].mxu0
    %v1591 = vadd.f32 %v1495, %v1590
    %v1592 = vpop.f32.mrb[0].mxu0
    %1593 = vdwg.mxu0
    %v1594 = vmul.f32 %v1277, %v1564
    %v1595 = vmul.f32 %v1278, %v1567
    %v1596 = vmul.f32 %v1279, %v1572
    %v1597 = vmul.f32 %v1280, %v1575
    %v1598 = vmul.f32 %v1281, %v1580
    %v1599 = vmul.f32 %v1282, %v1583
    %v1600 = vmul.f32 %v1283, %v1588
    %v1601 = vmul.f32 %v1284, %v1591
    %v1602 = vpack.c.bf16 %v1595, %v1594
    %v1603 = vpack.c.bf16 %v1597, %v1596
    %v1604 = vpack.c.bf16 %v1599, %v1598
    %v1605 = vpack.c.bf16 %v1601, %v1600
    %v1606 = vld [vmem:[#allocation13] sm:$0xf]
    %v1607 = vld [vmem:[#allocation13 + $0x4] sm:$0xf]
    %v1608 = vld [vmem:[#allocation13 + $0x8] sm:$0xf]
    %v1609 = vld [vmem:[#allocation13 + $0xc] sm:$0xf]
    %v1610 = vld [vmem:[#allocation13 + $0x10] sm:$0xf]
    %v1611 = vld [vmem:[#allocation13 + $0x14] sm:$0xf]
    %v1612 = vld [vmem:[#allocation13 + $0x18] sm:$0xf]
    %v1613 = vld [vmem:[#allocation13 + $0x1c] sm:$0xf]
    %v1614 = vld [vmem:[#allocation13 + $0x20] sm:$0xf]
    %v1615 = vld [vmem:[#allocation13 + $0x24] sm:$0xf]
    %v1616 = vld [vmem:[#allocation13 + $0x28] sm:$0xf]
    %v1617 = vld [vmem:[#allocation13 + $0x2c] sm:$0xf]
    %v1618 = vld [vmem:[#allocation13 + $0x30] sm:$0xf]
    %v1619 = vld [vmem:[#allocation13 + $0x34] sm:$0xf]
    %v1620 = vld [vmem:[#allocation13 + $0x38] sm:$0xf]
    %v1621 = vld [vmem:[#allocation13 + $0x3c] sm:$0xf]
    %v1622 = vlaneseq
    %v1623 = vshrl.u32 %v1622, 7
    %v1624 = vsub.s32 0, %v1623
    %v1625 = vrot.slane %v200, %v1624
    %v1642 = vunpack.c.l.b16 %v1606
    %v1643 = vunpack.c.l.b16 %v1607
    %v1644 = vunpack.c.l.b16 %v1608
    %v1645 = vunpack.c.l.b16 %v1609
    %v1646 = vunpack.c.l.b16 %v1610
    %v1647 = vunpack.c.l.b16 %v1611
    %v1648 = vunpack.c.l.b16 %v1612
    %v1649 = vunpack.c.l.b16 %v1613
    %v1650 = vunpack.c.l.b16 %v1614
    %v1651 = vunpack.c.l.b16 %v1615
    %v1652 = vunpack.c.l.b16 %v1616
    %v1653 = vunpack.c.l.b16 %v1617
    %v1654 = vunpack.c.l.b16 %v1618
    %v1655 = vunpack.c.l.b16 %v1619
    %v1656 = vunpack.c.l.b16 %v1620
    %v1657 = vunpack.c.l.b16 %v1621
    %v1658 = vpack.c.b16 %v1643, %v1642
    %v1659 = vpack.c.b16 %v1645, %v1644
    %v1660 = vpack.c.b16 %v1647, %v1646
    %v1661 = vpack.c.b16 %v1649, %v1648
    %v1662 = vpack.c.b16 %v1651, %v1650
    %v1663 = vpack.c.b16 %v1653, %v1652
    %v1664 = vpack.c.b16 %v1655, %v1654
    %v1665 = vpack.c.b16 %v1657, %v1656
    %1674 = vmatprep.subr.bf16.mxu0 0
    %1675 = vmatpush1.bf16.msra.mxu0 %v1658
    %1676 = vmatprep.subr.bf16.mxu0 0
    %1677 = vmatpush1.bf16.msra.mxu0 %v1659
    %1678 = vmatprep.subr.bf16.mxu0 0
    %1679 = vmatpush1.bf16.msra.mxu0 %v1660
    %1680 = vmatprep.subr.bf16.mxu0 0
    %1681 = vmatpush1.bf16.msra.mxu0 %v1661
    %1682 = vmatprep.subr.bf16.mxu0 0
    %1683 = vmatpush1.bf16.msra.mxu0 %v1662
    %1684 = vmatprep.subr.bf16.mxu0 0
    %1685 = vmatpush1.bf16.msra.mxu0 %v1663
    %1686 = vmatprep.subr.bf16.mxu0 0
    %1687 = vmatpush1.bf16.msra.mxu0 %v1664
    %1688 = vmatprep.subr.bf16.mxu0 0
    %1689 = vmatpush1.bf16.msra.mxu0 %v1665
    %1690 = vmatprep.subr.bf16.mxu0 0
    %1691 = vmatpush1.bf16.msra.mxu0 0
    %1692 = vmatprep.subr.bf16.mxu0 0
    %1693 = vmatpush1.bf16.msra.mxu0 0
    %1694 = vmatprep.subr.bf16.mxu0 0
    %1695 = vmatpush1.bf16.msra.mxu0 0
    %1696 = vmatprep.subr.bf16.mxu0 0
    %1697 = vmatpush1.bf16.msra.mxu0 0
    %1698 = vmatprep.subr.bf16.mxu0 0
    %1699 = vmatpush1.bf16.msra.mxu0 0
    %1700 = vmatprep.subr.bf16.mxu0 0
    %1701 = vmatpush1.bf16.msra.mxu0 0
    %1702 = vmatprep.subr.bf16.mxu0 0
    %1703 = vmatpush1.bf16.msra.mxu0 0
    %1704 = vmatprep.subr.bf16.mxu0 0
    %1705 = vmatpush1.bf16.msra.mxu0 0
    %1706 = vmatprep.mubr.bf16.mxu0 0
    %1707 = vmatmul.mubr.bf16.gmra.mrb[0].mxu0 %v1602
    %v1708 = vpop.f32.mrb[0].mxu0
    %v1709 = vadd.f32 %v1625, %v1708
    %v1710 = vpop.f32.mrb[0].mxu0
    %v1711 = vpop.f32.mrb[0].mxu0
    %v1712 = vadd.f32 %v1625, %v1711
    %v1713 = vpop.f32.mrb[0].mxu0
    %1714 = vmatprep.mubr.bf16.mxu0 0
    %1715 = vmatmul.mubr.bf16.gmra.mrb[0].mxu0 %v1603
    %v1716 = vpop.f32.mrb[0].mxu0
    %v1717 = vadd.f32 %v1625, %v1716
    %v1718 = vpop.f32.mrb[0].mxu0
    %v1719 = vpop.f32.mrb[0].mxu0
    %v1720 = vadd.f32 %v1625, %v1719
    %v1721 = vpop.f32.mrb[0].mxu0
    %1722 = vmatprep.mubr.bf16.mxu0 0
    %1723 = vmatmul.mubr.bf16.gmra.mrb[0].mxu0 %v1604
    %v1724 = vpop.f32.mrb[0].mxu0
    %v1725 = vadd.f32 %v1625, %v1724
    %v1726 = vpop.f32.mrb[0].mxu0
    %v1727 = vpop.f32.mrb[0].mxu0
    %v1728 = vadd.f32 %v1625, %v1727
    %v1729 = vpop.f32.mrb[0].mxu0
    %1730 = vmatprep.mubr.bf16.mxu0 0
    %1731 = vmatmul.mubr.bf16.gmra.mrb[0].mxu0 %v1605
    %v1732 = vpop.f32.mrb[0].mxu0
    %v1733 = vadd.f32 %v1625, %v1732
    %v1734 = vpop.f32.mrb[0].mxu0
    %v1735 = vpop.f32.mrb[0].mxu0
    %v1736 = vadd.f32 %v1625, %v1735
    %v1737 = vpop.f32.mrb[0].mxu0
    %1738 = vdwg.mxu0
    %v1739 = vadd.f32 %v1709, %v464
    %v1740 = vadd.f32 %v1712, %v465
    %v1741 = vadd.f32 %v1717, %v466
    %v1742 = vadd.f32 %v1720, %v467
    %v1743 = vadd.f32 %v1725, %v468
    %v1744 = vadd.f32 %v1728, %v469
    %v1745 = vadd.f32 %v1733, %v470
    %v1746 = vadd.f32 %v1736, %v471
    %v1747 = vpack.c.bf16 %v953, %v952
    %v1748 = vpack.c.bf16 %v1740, %v1739
    %v1749 = vpack.c.bf16 %v955, %v954
    %v1750 = vpack.c.bf16 %v1742, %v1741
    %v1751 = vpack.c.bf16 %v957, %v956
    %v1752 = vpack.c.bf16 %v1744, %v1743
    %v1753 = vpack.c.bf16 %v959, %v958
    %v1754 = vpack.c.bf16 %v1746, %v1745
    %v1755 = vld [vmem:[#allocation14] sm:$0xff]
    %v1756 = vld [vmem:[#allocation14 + $0x8] sm:$0xff]
    %v1757 = vld [vmem:[#allocation14 + $0x10] sm:$0xff]
    %v1758 = vld [vmem:[#allocation14 + $0x18] sm:$0xff]
    %v1759 = vld [vmem:[#allocation14 + $0x20] sm:$0xff]
    %v1760 = vld [vmem:[#allocation14 + $0x28] sm:$0xff]
    %v1761 = vld [vmem:[#allocation14 + $0x30] sm:$0xff]
    %v1762 = vld [vmem:[#allocation14 + $0x38] sm:$0xff]
    %v1763 = vld [vmem:[#allocation14 + $0x40] sm:$0xff]
    %v1764 = vld [vmem:[#allocation14 + $0x48] sm:$0xff]
    %v1765 = vld [vmem:[#allocation14 + $0x50] sm:$0xff]
    %v1766 = vld [vmem:[#allocation14 + $0x58] sm:$0xff]
    %v1767 = vld [vmem:[#allocation14 + $0x60] sm:$0xff]
    %v1768 = vld [vmem:[#allocation14 + $0x68] sm:$0xff]
    %v1769 = vld [vmem:[#allocation14 + $0x70] sm:$0xff]
    %v1770 = vld [vmem:[#allocation14 + $0x78] sm:$0xff]
    %v1771 = vld [vmem:[#allocation14 + $0x80] sm:$0xff]
    %v1772 = vld [vmem:[#allocation14 + $0x88] sm:$0xff]
    %v1773 = vld [vmem:[#allocation14 + $0x90] sm:$0xff]
    %v1774 = vld [vmem:[#allocation14 + $0x98] sm:$0xff]
    %v1775 = vld [vmem:[#allocation14 + $0xa0] sm:$0xff]
    %v1776 = vld [vmem:[#allocation14 + $0xa8] sm:$0xff]
    %v1777 = vld [vmem:[#allocation14 + $0xb0] sm:$0xff]
    %v1778 = vld [vmem:[#allocation14 + $0xb8] sm:$0xff]
    %v1779 = vld [vmem:[#allocation14 + $0xc0] sm:$0xff]
    %v1780 = vld [vmem:[#allocation14 + $0xc8] sm:$0xff]
    %v1781 = vld [vmem:[#allocation14 + $0xd0] sm:$0xff]
    %v1782 = vld [vmem:[#allocation14 + $0xd8] sm:$0xff]
    %v1783 = vld [vmem:[#allocation14 + $0xe0] sm:$0xff]
    %v1784 = vld [vmem:[#allocation14 + $0xe8] sm:$0xff]
    %v1785 = vld [vmem:[#allocation14 + $0xf0] sm:$0xff]
    %v1786 = vld [vmem:[#allocation14 + $0xf8] sm:$0xff]
    %v1788 = vlaneseq
    %v1789 = vshrl.u32 %v1788, 7
    %v1790 = vsub.s32 0, %v1789
    %v1791 = vrot.slane %v203, %v1790
    %v1792 = vlaneseq
    %v1793 = vshrl.u32 %v1792, 7
    %v1794 = vsub.s32 1, %v1793
    %v1795 = vrot.slane %v203, %v1794
    %v1830 = vunpack.c.l.b16 %v1755
    %v1831 = vunpack.c.h.b16 %v1755
    %v1832 = vunpack.c.l.b16 %v1756
    %v1833 = vunpack.c.h.b16 %v1756
    %v1834 = vunpack.c.l.b16 %v1757
    %v1835 = vunpack.c.h.b16 %v1757
    %v1836 = vunpack.c.l.b16 %v1758
    %v1837 = vunpack.c.h.b16 %v1758
    %v1838 = vunpack.c.l.b16 %v1759
    %v1839 = vunpack.c.h.b16 %v1759
    %v1840 = vunpack.c.l.b16 %v1760
    %v1841 = vunpack.c.h.b16 %v1760
    %v1842 = vunpack.c.l.b16 %v1761
    %v1843 = vunpack.c.h.b16 %v1761
    %v1844 = vunpack.c.l.b16 %v1762
    %v1845 = vunpack.c.h.b16 %v1762
    %v1846 = vunpack.c.l.b16 %v1763
    %v1847 = vunpack.c.h.b16 %v1763
    %v1848 = vunpack.c.l.b16 %v1764
    %v1849 = vunpack.c.h.b16 %v1764
    %v1850 = vunpack.c.l.b16 %v1765
    %v1851 = vunpack.c.h.b16 %v1765
    %v1852 = vunpack.c.l.b16 %v1766
    %v1853 = vunpack.c.h.b16 %v1766
    %v1854 = vunpack.c.l.b16 %v1767
    %v1855 = vunpack.c.h.b16 %v1767
    %v1856 = vunpack.c.l.b16 %v1768
    %v1857 = vunpack.c.h.b16 %v1768
    %v1858 = vunpack.c.l.b16 %v1769
    %v1859 = vunpack.c.h.b16 %v1769
    %v1860 = vunpack.c.l.b16 %v1770
    %v1861 = vunpack.c.h.b16 %v1770
    %v1862 = vunpack.c.l.b16 %v1771
    %v1863 = vunpack.c.h.b16 %v1771
    %v1864 = vunpack.c.l.b16 %v1772
    %v1865 = vunpack.c.h.b16 %v1772
    %v1866 = vunpack.c.l.b16 %v1773
    %v1867 = vunpack.c.h.b16 %v1773
    %v1868 = vunpack.c.l.b16 %v1774
    %v1869 = vunpack.c.h.b16 %v1774
    %v1870 = vunpack.c.l.b16 %v1775
    %v1871 = vunpack.c.h.b16 %v1775
    %v1872 = vunpack.c.l.b16 %v1776
    %v1873 = vunpack.c.h.b16 %v1776
    %v1874 = vunpack.c.l.b16 %v1777
    %v1875 = vunpack.c.h.b16 %v1777
    %v1876 = vunpack.c.l.b16 %v1778
    %v1877 = vunpack.c.h.b16 %v1778
    %v1878 = vunpack.c.l.b16 %v1779
    %v1879 = vunpack.c.h.b16 %v1779
    %v1880 = vunpack.c.l.b16 %v1780
    %v1881 = vunpack.c.h.b16 %v1780
    %v1882 = vunpack.c.l.b16 %v1781
    %v1883 = vunpack.c.h.b16 %v1781
    %v1884 = vunpack.c.l.b16 %v1782
    %v1885 = vunpack.c.h.b16 %v1782
    %v1886 = vunpack.c.l.b16 %v1783
    %v1887 = vunpack.c.h.b16 %v1783
    %v1888 = vunpack.c.l.b16 %v1784
    %v1889 = vunpack.c.h.b16 %v1784
    %v1890 = vunpack.c.l.b16 %v1785
    %v1891 = vunpack.c.h.b16 %v1785
    %v1892 = vunpack.c.l.b16 %v1786
    %v1893 = vunpack.c.h.b16 %v1786
    %v1894 = vpack.c.b16 %v1832, %v1830
    %v1895 = vpack.c.b16 %v1833, %v1831
    %v1896 = vpack.c.b16 %v1836, %v1834
    %v1897 = vpack.c.b16 %v1837, %v1835
    %v1898 = vpack.c.b16 %v1840, %v1838
    %v1899 = vpack.c.b16 %v1841, %v1839
    %v1900 = vpack.c.b16 %v1844, %v1842
    %v1901 = vpack.c.b16 %v1845, %v1843
    %v1902 = vpack.c.b16 %v1848, %v1846
    %v1903 = vpack.c.b16 %v1849, %v1847
    %v1904 = vpack.c.b16 %v1852, %v1850
    %v1905 = vpack.c.b16 %v1853, %v1851
    %v1906 = vpack.c.b16 %v1856, %v1854
    %v1907 = vpack.c.b16 %v1857, %v1855
    %v1908 = vpack.c.b16 %v1860, %v1858
    %v1909 = vpack.c.b16 %v1861, %v1859
    %v1910 = vpack.c.b16 %v1864, %v1862
    %v1911 = vpack.c.b16 %v1865, %v1863
    %v1912 = vpack.c.b16 %v1868, %v1866
    %v1913 = vpack.c.b16 %v1869, %v1867
    %v1914 = vpack.c.b16 %v1872, %v1870
    %v1915 = vpack.c.b16 %v1873, %v1871
    %v1916 = vpack.c.b16 %v1876, %v1874
    %v1917 = vpack.c.b16 %v1877, %v1875
    %v1918 = vpack.c.b16 %v1880, %v1878
    %v1919 = vpack.c.b16 %v1881, %v1879
    %v1920 = vpack.c.b16 %v1884, %v1882
    %v1921 = vpack.c.b16 %v1885, %v1883
    %v1922 = vpack.c.b16 %v1888, %v1886
    %v1923 = vpack.c.b16 %v1889, %v1887
    %v1924 = vpack.c.b16 %v1892, %v1890
    %v1925 = vpack.c.b16 %v1893, %v1891
    %1958 = vmatprep.subr.bf16.mxu0 %v1895
    %1959 = vmatpush1.bf16.msra.mxu0 %v1894
    %1960 = vmatprep.subr.bf16.mxu0 %v1897
    %1961 = vmatpush1.bf16.msra.mxu0 %v1896
    %1962 = vmatprep.subr.bf16.mxu0 %v1899
    %1963 = vmatpush1.bf16.msra.mxu0 %v1898
    %1964 = vmatprep.subr.bf16.mxu0 %v1901
    %1965 = vmatpush1.bf16.msra.mxu0 %v1900
    %1966 = vmatprep.subr.bf16.mxu0 %v1903
    %1967 = vmatpush1.bf16.msra.mxu0 %v1902
    %1968 = vmatprep.subr.bf16.mxu0 %v1905
    %1969 = vmatpush1.bf16.msra.mxu0 %v1904
    %1970 = vmatprep.subr.bf16.mxu0 %v1907
    %1971 = vmatpush1.bf16.msra.mxu0 %v1906
    %1972 = vmatprep.subr.bf16.mxu0 %v1909
    %1973 = vmatpush1.bf16.msra.mxu0 %v1908
    %1974 = vmatprep.subr.bf16.mxu0 %v1911
    %1975 = vmatpush1.bf16.msra.mxu0 %v1910
    %1976 = vmatprep.subr.bf16.mxu0 %v1913
    %1977 = vmatpush1.bf16.msra.mxu0 %v1912
    %1978 = vmatprep.subr.bf16.mxu0 %v1915
    %1979 = vmatpush1.bf16.msra.mxu0 %v1914
    %1980 = vmatprep.subr.bf16.mxu0 %v1917
    %1981 = vmatpush1.bf16.msra.mxu0 %v1916
    %1982 = vmatprep.subr.bf16.mxu0 %v1919
    %1983 = vmatpush1.bf16.msra.mxu0 %v1918
    %1984 = vmatprep.subr.bf16.mxu0 %v1921
    %1985 = vmatpush1.bf16.msra.mxu0 %v1920
    %1986 = vmatprep.subr.bf16.mxu0 %v1923
    %1987 = vmatpush1.bf16.msra.mxu0 %v1922
    %1988 = vmatprep.subr.bf16.mxu0 %v1925
    %1989 = vmatpush1.bf16.msra.mxu0 %v1924
    %1990 = vmatprep.mubr.bf16.mxu0 %v1748
    %1991 = vmatmul.mubr.bf16.gmra.mrb[0].mxu0 %v1747
    %v1992 = vpop.f32.mrb[0].mxu0
    %v1993 = vadd.f32 %v1791, %v1992
    %v1994 = vpop.f32.mrb[0].mxu0
    %v1995 = vadd.f32 %v1795, %v1994
    %v1996 = vpop.f32.mrb[0].mxu0
    %v1997 = vadd.f32 %v1791, %v1996
    %v1998 = vpop.f32.mrb[0].mxu0
    %v1999 = vadd.f32 %v1795, %v1998
    %2000 = vmatprep.mubr.bf16.mxu0 %v1750
    %2001 = vmatmul.mubr.bf16.gmra.mrb[0].mxu0 %v1749
    %v2002 = vpop.f32.mrb[0].mxu0
    %v2003 = vadd.f32 %v1791, %v2002
    %v2004 = vpop.f32.mrb[0].mxu0
    %v2005 = vadd.f32 %v1795, %v2004
    %v2006 = vpop.f32.mrb[0].mxu0
    %v2007 = vadd.f32 %v1791, %v2006
    %v2008 = vpop.f32.mrb[0].mxu0
    %v2009 = vadd.f32 %v1795, %v2008
    %2010 = vmatprep.mubr.bf16.mxu0 %v1752
    %2011 = vmatmul.mubr.bf16.gmra.mrb[0].mxu0 %v1751
    %v2012 = vpop.f32.mrb[0].mxu0
    %v2013 = vadd.f32 %v1791, %v2012
    %v2014 = vpop.f32.mrb[0].mxu0
    %v2015 = vadd.f32 %v1795, %v2014
    %v2016 = vpop.f32.mrb[0].mxu0
    %v2017 = vadd.f32 %v1791, %v2016
    %v2018 = vpop.f32.mrb[0].mxu0
    %v2019 = vadd.f32 %v1795, %v2018
    %2020 = vmatprep.mubr.bf16.mxu0 %v1754
    %2021 = vmatmul.mubr.bf16.gmra.mrb[0].mxu0 %v1753
    %v2022 = vpop.f32.mrb[0].mxu0
    %v2023 = vadd.f32 %v1791, %v2022
    %v2024 = vpop.f32.mrb[0].mxu0
    %v2025 = vadd.f32 %v1795, %v2024
    %v2026 = vpop.f32.mrb[0].mxu0
    %v2027 = vadd.f32 %v1791, %v2026
    %v2028 = vpop.f32.mrb[0].mxu0
    %v2029 = vadd.f32 %v1795, %v2028
    %2030 = vdwg.mxu0
    %v2031 = vmul.f32 %v1993, %v1993
    %v2032 = vmul.f32 %v1997, %v1997
    %v2033 = vmul.f32 %v2003, %v2003
    %v2034 = vmul.f32 %v2007, %v2007
    %v2035 = vmul.f32 %v2013, %v2013
    %v2036 = vmul.f32 %v2017, %v2017
    %v2037 = vmul.f32 %v2023, %v2023
    %v2038 = vmul.f32 %v2027, %v2027
    %v2039 = vmul.f32 %v1993, %v2031
    %v2040 = vmul.f32 %v1997, %v2032
    %v2041 = vmul.f32 %v2003, %v2033
    %v2042 = vmul.f32 %v2007, %v2034
    %v2043 = vmul.f32 %v2013, %v2035
    %v2044 = vmul.f32 %v2017, %v2036
    %v2045 = vmul.f32 %v2023, %v2037
    %v2046 = vmul.f32 %v2027, %v2038
    %v2047 = vmul.f32 %v2039, 0.044715
    %v2048 = vmul.f32 %v2040, 0.044715
    %v2049 = vmul.f32 %v2041, 0.044715
    %v2050 = vmul.f32 %v2042, 0.044715
    %v2051 = vmul.f32 %v2043, 0.044715
    %v2052 = vmul.f32 %v2044, 0.044715
    %v2053 = vmul.f32 %v2045, 0.044715
    %v2054 = vmul.f32 %v2046, 0.044715
    %v2055 = vadd.f32 %v1993, %v2047
    %v2056 = vadd.f32 %v1997, %v2048
    %v2057 = vadd.f32 %v2003, %v2049
    %v2058 = vadd.f32 %v2007, %v2050
    %v2059 = vadd.f32 %v2013, %v2051
    %v2060 = vadd.f32 %v2017, %v2052
    %v2061 = vadd.f32 %v2023, %v2053
    %v2062 = vadd.f32 %v2027, %v2054
    %v2063 = vmul.f32 %v2055, 0.7978846
    %v2064 = vmul.f32 %v2056, 0.7978846
    %v2065 = vmul.f32 %v2057, 0.7978846
    %v2066 = vmul.f32 %v2058, 0.7978846
    %v2067 = vmul.f32 %v2059, 0.7978846
    %v2068 = vmul.f32 %v2060, 0.7978846
    %v2069 = vmul.f32 %v2061, 0.7978846
    %v2070 = vmul.f32 %v2062, 0.7978846
    %v2071 = vtanh.pop %v2063
    %v2072 = vtanh.pop %v2064
    %v2073 = vtanh.pop %v2065
    %v2074 = vtanh.pop %v2066
    %v2075 = vtanh.pop %v2067
    %v2076 = vtanh.pop %v2068
    %v2077 = vtanh.pop %v2069
    %v2078 = vtanh.pop %v2070
    %v2079 = vadd.f32 %v2071, 1.0
    %v2080 = vadd.f32 %v2072, 1.0
    %v2081 = vadd.f32 %v2073, 1.0
    %v2082 = vadd.f32 %v2074, 1.0
    %v2083 = vadd.f32 %v2075, 1.0
    %v2084 = vadd.f32 %v2076, 1.0
    %v2085 = vadd.f32 %v2077, 1.0
    %v2086 = vadd.f32 %v2078, 1.0
    %v2087 = vmul.f32 %v2079, 0.5
    %v2088 = vmul.f32 %v2080, 0.5
    %v2089 = vmul.f32 %v2081, 0.5
    %v2090 = vmul.f32 %v2082, 0.5
    %v2091 = vmul.f32 %v2083, 0.5
    %v2092 = vmul.f32 %v2084, 0.5
    %v2093 = vmul.f32 %v2085, 0.5
    %v2094 = vmul.f32 %v2086, 0.5
    %v2095 = vmul.f32 %v1993, %v2087
    %v2096 = vmul.f32 %v1997, %v2088
    %v2097 = vmul.f32 %v2003, %v2089
    %v2098 = vmul.f32 %v2007, %v2090
    %v2099 = vmul.f32 %v2013, %v2091
    %v2100 = vmul.f32 %v2017, %v2092
    %v2101 = vmul.f32 %v2023, %v2093
    %v2102 = vmul.f32 %v2027, %v2094
    %v2103 = vmul.f32 %v2095, %v1995
    %v2104 = vmul.f32 %v2096, %v1999
    %v2105 = vmul.f32 %v2097, %v2005
    %v2106 = vmul.f32 %v2098, %v2009
    %v2107 = vmul.f32 %v2099, %v2015
    %v2108 = vmul.f32 %v2100, %v2019
    %v2109 = vmul.f32 %v2101, %v2025
    %v2110 = vmul.f32 %v2102, %v2029
    %v2111 = vadd.f32 %v2103, %v185
    %v2112 = vadd.f32 %v2104, %v186
    %v2113 = vadd.f32 %v2105, %v187
    %v2114 = vadd.f32 %v2106, %v188
    %v2115 = vadd.f32 %v2107, %v189
    %v2116 = vadd.f32 %v2108, %v190
    %v2117 = vadd.f32 %v2109, %v191
    %v2118 = vadd.f32 %v2110, %v192
    %v2119 = vmul.f32 %v2111, %v2111
    %v2120 = vmul.f32 %v2112, %v2112
    %v2121 = vmul.f32 %v2113, %v2113
    %v2122 = vmul.f32 %v2114, %v2114
    %v2123 = vmul.f32 %v2115, %v2115
    %v2124 = vmul.f32 %v2116, %v2116
    %v2125 = vmul.f32 %v2117, %v2117
    %v2126 = vmul.f32 %v2118, %v2118
    %2127 = vadd.xlane.f32.xlu0 %v2119
    %v2128 = vpop.xlane.xlu0 %2127
    %2129 = vadd.xlane.f32.xlu0 %v2120
    %v2130 = vpop.xlane.xlu0 %2129
    %2131 = vadd.xlane.f32.xlu0 %v2121
    %v2132 = vpop.xlane.xlu0 %2131
    %2133 = vadd.xlane.f32.xlu0 %v2122
    %v2134 = vpop.xlane.xlu0 %2133
    %2135 = vadd.xlane.f32.xlu0 %v2123
    %v2136 = vpop.xlane.xlu0 %2135
    %2137 = vadd.xlane.f32.xlu0 %v2124
    %v2138 = vpop.xlane.xlu0 %2137
    %2139 = vadd.xlane.f32.xlu0 %v2125
    %v2140 = vpop.xlane.xlu0 %2139
    %2141 = vadd.xlane.f32.xlu0 %v2126
    %v2142 = vpop.xlane.xlu0 %2141
    %v2143 = vmul.f32 %v2128, %v230
    %v2144 = vmul.f32 %v2130, %v230
    %v2145 = vmul.f32 %v2132, %v230
    %v2146 = vmul.f32 %v2134, %v230
    %v2147 = vmul.f32 %v2136, %v230
    %v2148 = vmul.f32 %v2138, %v230
    %v2149 = vmul.f32 %v2140, %v230
    %v2150 = vmul.f32 %v2142, %v230
    %v2151 = vadd.f32 %v2143, 1e-08
    %v2152 = vadd.f32 %v2144, 1e-08
    %v2153 = vadd.f32 %v2145, 1e-08
    %v2154 = vadd.f32 %v2146, 1e-08
    %v2155 = vadd.f32 %v2147, 1e-08
    %v2156 = vadd.f32 %v2148, 1e-08
    %v2157 = vadd.f32 %v2149, 1e-08
    %v2158 = vadd.f32 %v2150, 1e-08
    %v2159 = vrsqrt.pop %v2151
    %v2160 = vrsqrt.pop %v2152
    %v2161 = vrsqrt.pop %v2153
    %v2162 = vrsqrt.pop %v2154
    %v2163 = vrsqrt.pop %v2155
    %v2164 = vrsqrt.pop %v2156
    %v2165 = vrsqrt.pop %v2157
    %v2166 = vrsqrt.pop %v2158
    %v2167 = vmul.f32 %v2111, %v2159
    %v2168 = vmul.f32 %v2112, %v2160
    %v2169 = vmul.f32 %v2113, %v2161
    %v2170 = vmul.f32 %v2114, %v2162
    %v2171 = vmul.f32 %v2115, %v2163
    %v2172 = vmul.f32 %v2116, %v2164
    %v2173 = vmul.f32 %v2117, %v2165
    %v2174 = vmul.f32 %v2118, %v2166
    %v2175 = vlaneseq
    %v2176 = vshrl.u32 %v2175, 7
    %v2177 = vsub.s32 0, %v2176
    %v2178 = vrot.slane %v201, %v2177
    %v2179 = vmul.f32 %v2167, %v2178
    %v2180 = vmul.f32 %v2168, %v2178
    %v2181 = vmul.f32 %v2169, %v2178
    %v2182 = vmul.f32 %v2170, %v2178
    %v2183 = vmul.f32 %v2171, %v2178
    %v2184 = vmul.f32 %v2172, %v2178
    %v2185 = vmul.f32 %v2173, %v2178
    %v2186 = vmul.f32 %v2174, %v2178
    %v2187 = vpack.c.bf16 %v2180, %v2179
    %v2188 = vpack.c.bf16 %v2182, %v2181
    %v2189 = vpack.c.bf16 %v2184, %v2183
    %v2190 = vpack.c.bf16 %v2186, %v2185
    %v2191 = vld [vmem:[#allocation16] sm:$0xff]
    %v2192 = vld [vmem:[#allocation16 + $0x8] sm:$0xff]
    %v2193 = vld [vmem:[#allocation16 + $0x10] sm:$0xff]
    %v2194 = vld [vmem:[#allocation16 + $0x18] sm:$0xff]
    %v2195 = vld [vmem:[#allocation16 + $0x20] sm:$0xff]
    %v2196 = vld [vmem:[#allocation16 + $0x28] sm:$0xff]
    %v2197 = vld [vmem:[#allocation16 + $0x30] sm:$0xff]
    %v2198 = vld [vmem:[#allocation16 + $0x38] sm:$0xff]
    %v2199 = vld [vmem:[#allocation16 + $0x40] sm:$0xff]
    %v2200 = vld [vmem:[#allocation16 + $0x48] sm:$0xff]
    %v2201 = vld [vmem:[#allocation16 + $0x50] sm:$0xff]
    %v2202 = vld [vmem:[#allocation16 + $0x58] sm:$0xff]
    %v2203 = vld [vmem:[#allocation16 + $0x60] sm:$0xff]
    %v2204 = vld [vmem:[#allocation16 + $0x68] sm:$0xff]
    %v2205 = vld [vmem:[#allocation16 + $0x70] sm:$0xff]
    %v2206 = vld [vmem:[#allocation16 + $0x78] sm:$0xff]
    %v2208 = vlaneseq
    %v2209 = vshrl.u32 %v2208, 7
    %v2210 = vsub.s32 0, %v2209
    %v2211 = vrot.slane %v205, %v2210
    %v2212 = vlaneseq
    %v2213 = vshrl.u32 %v2212, 7
    %v2214 = vsub.s32 1, %v2213
    %v2215 = vrot.slane %v205, %v2214
    %v2234 = vunpack.c.l.b16 %v2191
    %v2235 = vunpack.c.h.b16 %v2191
    %v2236 = vunpack.c.l.b16 %v2192
    %v2237 = vunpack.c.h.b16 %v2192
    %v2238 = vunpack.c.l.b16 %v2193
    %v2239 = vunpack.c.h.b16 %v2193
    %v2240 = vunpack.c.l.b16 %v2194
    %v2241 = vunpack.c.h.b16 %v2194
    %v2242 = vunpack.c.l.b16 %v2195
    %v2243 = vunpack.c.h.b16 %v2195
    %v2244 = vunpack.c.l.b16 %v2196
    %v2245 = vunpack.c.h.b16 %v2196
    %v2246 = vunpack.c.l.b16 %v2197
    %v2247 = vunpack.c.h.b16 %v2197
    %v2248 = vunpack.c.l.b16 %v2198
    %v2249 = vunpack.c.h.b16 %v2198
    %v2250 = vunpack.c.l.b16 %v2199
    %v2251 = vunpack.c.h.b16 %v2199
    %v2252 = vunpack.c.l.b16 %v2200
    %v2253 = vunpack.c.h.b16 %v2200
    %v2254 = vunpack.c.l.b16 %v2201
    %v2255 = vunpack.c.h.b16 %v2201
    %v2256 = vunpack.c.l.b16 %v2202
    %v2257 = vunpack.c.h.b16 %v2202
    %v2258 = vunpack.c.l.b16 %v2203
    %v2259 = vunpack.c.h.b16 %v2203
    %v2260 = vunpack.c.l.b16 %v2204
    %v2261 = vunpack.c.h.b16 %v2204
    %v2262 = vunpack.c.l.b16 %v2205
    %v2263 = vunpack.c.h.b16 %v2205
    %v2264 = vunpack.c.l.b16 %v2206
    %v2265 = vunpack.c.h.b16 %v2206
    %v2266 = vpack.c.b16 %v2236, %v2234
    %v2267 = vpack.c.b16 %v2237, %v2235
    %v2268 = vpack.c.b16 %v2240, %v2238
    %v2269 = vpack.c.b16 %v2241, %v2239
    %v2270 = vpack.c.b16 %v2244, %v2242
    %v2271 = vpack.c.b16 %v2245, %v2243
    %v2272 = vpack.c.b16 %v2248, %v2246
    %v2273 = vpack.c.b16 %v2249, %v2247
    %v2274 = vpack.c.b16 %v2252, %v2250
    %v2275 = vpack.c.b16 %v2253, %v2251
    %v2276 = vpack.c.b16 %v2256, %v2254
    %v2277 = vpack.c.b16 %v2257, %v2255
    %v2278 = vpack.c.b16 %v2260, %v2258
    %v2279 = vpack.c.b16 %v2261, %v2259
    %v2280 = vpack.c.b16 %v2264, %v2262
    %v2281 = vpack.c.b16 %v2265, %v2263
    %2298 = vmatprep.subr.bf16.mxu0 %v2267
    %2299 = vmatpush1.bf16.msra.mxu0 %v2266
    %2300 = vmatprep.subr.bf16.mxu0 %v2269
    %2301 = vmatpush1.bf16.msra.mxu0 %v2268
    %2302 = vmatprep.subr.bf16.mxu0 %v2271
    %2303 = vmatpush1.bf16.msra.mxu0 %v2270
    %2304 = vmatprep.subr.bf16.mxu0 %v2273
    %2305 = vmatpush1.bf16.msra.mxu0 %v2272
    %2306 = vmatprep.subr.bf16.mxu0 %v2275
    %2307 = vmatpush1.bf16.msra.mxu0 %v2274
    %2308 = vmatprep.subr.bf16.mxu0 %v2277
    %2309 = vmatpush1.bf16.msra.mxu0 %v2276
    %2310 = vmatprep.subr.bf16.mxu0 %v2279
    %2311 = vmatpush1.bf16.msra.mxu0 %v2278
    %2312 = vmatprep.subr.bf16.mxu0 %v2281
    %2313 = vmatpush1.bf16.msra.mxu0 %v2280
    %2314 = vmatprep.subr.bf16.mxu0 0
    %2315 = vmatpush1.bf16.msra.mxu0 0
    %2316 = vmatprep.subr.bf16.mxu0 0
    %2317 = vmatpush1.bf16.msra.mxu0 0
    %2318 = vmatprep.subr.bf16.mxu0 0
    %2319 = vmatpush1.bf16.msra.mxu0 0
    %2320 = vmatprep.subr.bf16.mxu0 0
    %2321 = vmatpush1.bf16.msra.mxu0 0
    %2322 = vmatprep.subr.bf16.mxu0 0
    %2323 = vmatpush1.bf16.msra.mxu0 0
    %2324 = vmatprep.subr.bf16.mxu0 0
    %2325 = vmatpush1.bf16.msra.mxu0 0
    %2326 = vmatprep.subr.bf16.mxu0 0
    %2327 = vmatpush1.bf16.msra.mxu0 0
    %2328 = vmatprep.subr.bf16.mxu0 0
    %2329 = vmatpush1.bf16.msra.mxu0 0
    %2330 = vmatprep.mubr.bf16.mxu0 0
    %2331 = vmatmul.mubr.bf16.gmra.mrb[0].mxu0 %v2187
    %v2332 = vpop.f32.mrb[0].mxu0
    %v2333 = vadd.f32 %v2211, %v2332
    %v2334 = vpop.f32.mrb[0].mxu0
    %v2335 = vadd.f32 %v2215, %v2334
    %v2336 = vpop.f32.mrb[0].mxu0
    %v2337 = vadd.f32 %v2211, %v2336
    %v2338 = vpop.f32.mrb[0].mxu0
    %v2339 = vadd.f32 %v2215, %v2338
    %2340 = vmatprep.mubr.bf16.mxu0 0
    %2341 = vmatmul.mubr.bf16.gmra.mrb[0].mxu0 %v2188
    %v2342 = vpop.f32.mrb[0].mxu0
    %v2343 = vadd.f32 %v2211, %v2342
    %v2344 = vpop.f32.mrb[0].mxu0
    %v2345 = vadd.f32 %v2215, %v2344
    %v2346 = vpop.f32.mrb[0].mxu0
    %v2347 = vadd.f32 %v2211, %v2346
    %v2348 = vpop.f32.mrb[0].mxu0
    %v2349 = vadd.f32 %v2215, %v2348
    %2350 = vmatprep.mubr.bf16.mxu0 0
    %2351 = vmatmul.mubr.bf16.gmra.mrb[0].mxu0 %v2189
    %v2352 = vpop.f32.mrb[0].mxu0
    %v2353 = vadd.f32 %v2211, %v2352
    %v2354 = vpop.f32.mrb[0].mxu0
    %v2355 = vadd.f32 %v2215, %v2354
    %v2356 = vpop.f32.mrb[0].mxu0
    %v2357 = vadd.f32 %v2211, %v2356
    %v2358 = vpop.f32.mrb[0].mxu0
    %v2359 = vadd.f32 %v2215, %v2358
    %2360 = vmatprep.mubr.bf16.mxu0 0
    %2361 = vmatmul.mubr.bf16.gmra.mrb[0].mxu0 %v2190
    %v2362 = vpop.f32.mrb[0].mxu0
    %v2363 = vadd.f32 %v2211, %v2362
    %v2364 = vpop.f32.mrb[0].mxu0
    %v2365 = vadd.f32 %v2215, %v2364
    %v2366 = vpop.f32.mrb[0].mxu0
    %v2367 = vadd.f32 %v2211, %v2366
    %v2368 = vpop.f32.mrb[0].mxu0
    %v2369 = vadd.f32 %v2215, %v2368
    %2370 = vdwg.mxu0
    %v2371 = vmul.f32 %v2333, %v2333
    %v2372 = vmul.f32 %v2335, %v2335
    %v2373 = vmul.f32 %v2337, %v2337
    %v2374 = vmul.f32 %v2339, %v2339
    %v2375 = vmul.f32 %v2343, %v2343
    %v2376 = vmul.f32 %v2345, %v2345
    %v2377 = vmul.f32 %v2347, %v2347
    %v2378 = vmul.f32 %v2349, %v2349
    %v2379 = vmul.f32 %v2353, %v2353
    %v2380 = vmul.f32 %v2355, %v2355
    %v2381 = vmul.f32 %v2357, %v2357
    %v2382 = vmul.f32 %v2359, %v2359
    %v2383 = vmul.f32 %v2363, %v2363
    %v2384 = vmul.f32 %v2365, %v2365
    %v2385 = vmul.f32 %v2367, %v2367
    %v2386 = vmul.f32 %v2369, %v2369
    %v2387 = vmul.f32 %v2333, %v2371
    %v2388 = vmul.f32 %v2335, %v2372
    %v2389 = vmul.f32 %v2337, %v2373
    %v2390 = vmul.f32 %v2339, %v2374
    %v2391 = vmul.f32 %v2343, %v2375
    %v2392 = vmul.f32 %v2345, %v2376
    %v2393 = vmul.f32 %v2347, %v2377
    %v2394 = vmul.f32 %v2349, %v2378
    %v2395 = vmul.f32 %v2353, %v2379
    %v2396 = vmul.f32 %v2355, %v2380
    %v2397 = vmul.f32 %v2357, %v2381
    %v2398 = vmul.f32 %v2359, %v2382
    %v2399 = vmul.f32 %v2363, %v2383
    %v2400 = vmul.f32 %v2365, %v2384
    %v2401 = vmul.f32 %v2367, %v2385
    %v2402 = vmul.f32 %v2369, %v2386
    %v2403 = vmul.f32 %v2387, 0.044715
    %v2404 = vmul.f32 %v2388, 0.044715
    %v2405 = vmul.f32 %v2389, 0.044715
    %v2406 = vmul.f32 %v2390, 0.044715
    %v2407 = vmul.f32 %v2391, 0.044715
    %v2408 = vmul.f32 %v2392, 0.044715
    %v2409 = vmul.f32 %v2393, 0.044715
    %v2410 = vmul.f32 %v2394, 0.044715
    %v2411 = vmul.f32 %v2395, 0.044715
    %v2412 = vmul.f32 %v2396, 0.044715
    %v2413 = vmul.f32 %v2397, 0.044715
    %v2414 = vmul.f32 %v2398, 0.044715
    %v2415 = vmul.f32 %v2399, 0.044715
    %v2416 = vmul.f32 %v2400, 0.044715
    %v2417 = vmul.f32 %v2401, 0.044715
    %v2418 = vmul.f32 %v2402, 0.044715
    %v2419 = vadd.f32 %v2333, %v2403
    %v2420 = vadd.f32 %v2335, %v2404
    %v2421 = vadd.f32 %v2337, %v2405
    %v2422 = vadd.f32 %v2339, %v2406
    %v2423 = vadd.f32 %v2343, %v2407
    %v2424 = vadd.f32 %v2345, %v2408
    %v2425 = vadd.f32 %v2347, %v2409
    %v2426 = vadd.f32 %v2349, %v2410
    %v2427 = vadd.f32 %v2353, %v2411
    %v2428 = vadd.f32 %v2355, %v2412
    %v2429 = vadd.f32 %v2357, %v2413
    %v2430 = vadd.f32 %v2359, %v2414
    %v2431 = vadd.f32 %v2363, %v2415
    %v2432 = vadd.f32 %v2365, %v2416
    %v2433 = vadd.f32 %v2367, %v2417
    %v2434 = vadd.f32 %v2369, %v2418
    %v2435 = vmul.f32 %v2419, 0.7978846
    %v2436 = vmul.f32 %v2420, 0.7978846
    %v2437 = vmul.f32 %v2421, 0.7978846
    %v2438 = vmul.f32 %v2422, 0.7978846
    %v2439 = vmul.f32 %v2423, 0.7978846
    %v2440 = vmul.f32 %v2424, 0.7978846
    %v2441 = vmul.f32 %v2425, 0.7978846
    %v2442 = vmul.f32 %v2426, 0.7978846
    %v2443 = vmul.f32 %v2427, 0.7978846
    %v2444 = vmul.f32 %v2428, 0.7978846
    %v2445 = vmul.f32 %v2429, 0.7978846
    %v2446 = vmul.f32 %v2430, 0.7978846
    %v2447 = vmul.f32 %v2431, 0.7978846
    %v2448 = vmul.f32 %v2432, 0.7978846
    %v2449 = vmul.f32 %v2433, 0.7978846
    %v2450 = vmul.f32 %v2434, 0.7978846
    %v2451 = vtanh.pop %v2435
    %v2452 = vtanh.pop %v2436
    %v2453 = vtanh.pop %v2437
    %v2454 = vtanh.pop %v2438
    %v2455 = vtanh.pop %v2439
    %v2456 = vtanh.pop %v2440
    %v2457 = vtanh.pop %v2441
    %v2458 = vtanh.pop %v2442
    %v2459 = vtanh.pop %v2443
    %v2460 = vtanh.pop %v2444
    %v2461 = vtanh.pop %v2445
    %v2462 = vtanh.pop %v2446
    %v2463 = vtanh.pop %v2447
    %v2464 = vtanh.pop %v2448
    %v2465 = vtanh.pop %v2449
    %v2466 = vtanh.pop %v2450
    %v2467 = vadd.f32 %v2451, 1.0
    %v2468 = vadd.f32 %v2452, 1.0
    %v2469 = vadd.f32 %v2453, 1.0
    %v2470 = vadd.f32 %v2454, 1.0
    %v2471 = vadd.f32 %v2455, 1.0
    %v2472 = vadd.f32 %v2456, 1.0
    %v2473 = vadd.f32 %v2457, 1.0
    %v2474 = vadd.f32 %v2458, 1.0
    %v2475 = vadd.f32 %v2459, 1.0
    %v2476 = vadd.f32 %v2460, 1.0
    %v2477 = vadd.f32 %v2461, 1.0
    %v2478 = vadd.f32 %v2462, 1.0
    %v2479 = vadd.f32 %v2463, 1.0
    %v2480 = vadd.f32 %v2464, 1.0
    %v2481 = vadd.f32 %v2465, 1.0
    %v2482 = vadd.f32 %v2466, 1.0
    %v2483 = vmul.f32 %v2467, 0.5
    %v2484 = vmul.f32 %v2468, 0.5
    %v2485 = vmul.f32 %v2469, 0.5
    %v2486 = vmul.f32 %v2470, 0.5
    %v2487 = vmul.f32 %v2471, 0.5
    %v2488 = vmul.f32 %v2472, 0.5
    %v2489 = vmul.f32 %v2473, 0.5
    %v2490 = vmul.f32 %v2474, 0.5
    %v2491 = vmul.f32 %v2475, 0.5
    %v2492 = vmul.f32 %v2476, 0.5
    %v2493 = vmul.f32 %v2477, 0.5
    %v2494 = vmul.f32 %v2478, 0.5
    %v2495 = vmul.f32 %v2479, 0.5
    %v2496 = vmul.f32 %v2480, 0.5
    %v2497 = vmul.f32 %v2481, 0.5
    %v2498 = vmul.f32 %v2482, 0.5
    %v2499 = vmul.f32 %v2333, %v2483
    %v2500 = vmul.f32 %v2335, %v2484
    %v2501 = vmul.f32 %v2337, %v2485
    %v2502 = vmul.f32 %v2339, %v2486
    %v2503 = vmul.f32 %v2343, %v2487
    %v2504 = vmul.f32 %v2345, %v2488
    %v2505 = vmul.f32 %v2347, %v2489
    %v2506 = vmul.f32 %v2349, %v2490
    %v2507 = vmul.f32 %v2353, %v2491
    %v2508 = vmul.f32 %v2355, %v2492
    %v2509 = vmul.f32 %v2357, %v2493
    %v2510 = vmul.f32 %v2359, %v2494
    %v2511 = vmul.f32 %v2363, %v2495
    %v2512 = vmul.f32 %v2365, %v2496
    %v2513 = vmul.f32 %v2367, %v2497
    %v2514 = vmul.f32 %v2369, %v2498
    %v2515 = vpack.c.bf16 %v2501, %v2499
    %v2516 = vpack.c.bf16 %v2502, %v2500
    %v2517 = vpack.c.bf16 %v2505, %v2503
    %v2518 = vpack.c.bf16 %v2506, %v2504
    %v2519 = vpack.c.bf16 %v2509, %v2507
    %v2520 = vpack.c.bf16 %v2510, %v2508
    %v2521 = vpack.c.bf16 %v2513, %v2511
    %v2522 = vpack.c.bf16 %v2514, %v2512
    %v2523 = vld [vmem:[#allocation17] sm:$0xf]
    %v2524 = vld [vmem:[#allocation17 + $0x4] sm:$0xf]
    %v2525 = vld [vmem:[#allocation17 + $0x8] sm:$0xf]
    %v2526 = vld [vmem:[#allocation17 + $0xc] sm:$0xf]
    %v2527 = vld [vmem:[#allocation17 + $0x10] sm:$0xf]
    %v2528 = vld [vmem:[#allocation17 + $0x14] sm:$0xf]
    %v2529 = vld [vmem:[#allocation17 + $0x18] sm:$0xf]
    %v2530 = vld [vmem:[#allocation17 + $0x1c] sm:$0xf]
    %v2531 = vld [vmem:[#allocation17 + $0x20] sm:$0xf]
    %v2532 = vld [vmem:[#allocation17 + $0x24] sm:$0xf]
    %v2533 = vld [vmem:[#allocation17 + $0x28] sm:$0xf]
    %v2534 = vld [vmem:[#allocation17 + $0x2c] sm:$0xf]
    %v2535 = vld [vmem:[#allocation17 + $0x30] sm:$0xf]
    %v2536 = vld [vmem:[#allocation17 + $0x34] sm:$0xf]
    %v2537 = vld [vmem:[#allocation17 + $0x38] sm:$0xf]
    %v2538 = vld [vmem:[#allocation17 + $0x3c] sm:$0xf]
    %v2539 = vld [vmem:[#allocation17 + $0x40] sm:$0xf]
    %v2540 = vld [vmem:[#allocation17 + $0x44] sm:$0xf]
    %v2541 = vld [vmem:[#allocation17 + $0x48] sm:$0xf]
    %v2542 = vld [vmem:[#allocation17 + $0x4c] sm:$0xf]
    %v2543 = vld [vmem:[#allocation17 + $0x50] sm:$0xf]
    %v2544 = vld [vmem:[#allocation17 + $0x54] sm:$0xf]
    %v2545 = vld [vmem:[#allocation17 + $0x58] sm:$0xf]
    %v2546 = vld [vmem:[#allocation17 + $0x5c] sm:$0xf]
    %v2547 = vld [vmem:[#allocation17 + $0x60] sm:$0xf]
    %v2548 = vld [vmem:[#allocation17 + $0x64] sm:$0xf]
    %v2549 = vld [vmem:[#allocation17 + $0x68] sm:$0xf]
    %v2550 = vld [vmem:[#allocation17 + $0x6c] sm:$0xf]
    %v2551 = vld [vmem:[#allocation17 + $0x70] sm:$0xf]
    %v2552 = vld [vmem:[#allocation17 + $0x74] sm:$0xf]
    %v2553 = vld [vmem:[#allocation17 + $0x78] sm:$0xf]
    %v2554 = vld [vmem:[#allocation17 + $0x7c] sm:$0xf]
    %v2555 = vlaneseq
    %v2556 = vshrl.u32 %v2555, 7
    %v2557 = vsub.s32 0, %v2556
    %v2558 = vrot.slane %v202, %v2557
    %v2591 = vunpack.c.l.b16 %v2523
    %v2592 = vunpack.c.l.b16 %v2524
    %v2593 = vunpack.c.l.b16 %v2525
    %v2594 = vunpack.c.l.b16 %v2526
    %v2595 = vunpack.c.l.b16 %v2527
    %v2596 = vunpack.c.l.b16 %v2528
    %v2597 = vunpack.c.l.b16 %v2529
    %v2598 = vunpack.c.l.b16 %v2530
    %v2599 = vunpack.c.l.b16 %v2531
    %v2600 = vunpack.c.l.b16 %v2532
    %v2601 = vunpack.c.l.b16 %v2533
    %v2602 = vunpack.c.l.b16 %v2534
    %v2603 = vunpack.c.l.b16 %v2535
    %v2604 = vunpack.c.l.b16 %v2536
    %v2605 = vunpack.c.l.b16 %v2537
    %v2606 = vunpack.c.l.b16 %v2538
    %v2607 = vunpack.c.l.b16 %v2539
    %v2608 = vunpack.c.l.b16 %v2540
    %v2609 = vunpack.c.l.b16 %v2541
    %v2610 = vunpack.c.l.b16 %v2542
    %v2611 = vunpack.c.l.b16 %v2543
    %v2612 = vunpack.c.l.b16 %v2544
    %v2613 = vunpack.c.l.b16 %v2545
    %v2614 = vunpack.c.l.b16 %v2546
    %v2615 = vunpack.c.l.b16 %v2547
    %v2616 = vunpack.c.l.b16 %v2548
    %v2617 = vunpack.c.l.b16 %v2549
    %v2618 = vunpack.c.l.b16 %v2550
    %v2619 = vunpack.c.l.b16 %v2551
    %v2620 = vunpack.c.l.b16 %v2552
    %v2621 = vunpack.c.l.b16 %v2553
    %v2622 = vunpack.c.l.b16 %v2554
    %v2623 = vpack.c.b16 %v2592, %v2591
    %v2624 = vpack.c.b16 %v2594, %v2593
    %v2625 = vpack.c.b16 %v2596, %v2595
    %v2626 = vpack.c.b16 %v2598, %v2597
    %v2627 = vpack.c.b16 %v2600, %v2599
    %v2628 = vpack.c.b16 %v2602, %v2601
    %v2629 = vpack.c.b16 %v2604, %v2603
    %v2630 = vpack.c.b16 %v2606, %v2605
    %v2631 = vpack.c.b16 %v2608, %v2607
    %v2632 = vpack.c.b16 %v2610, %v2609
    %v2633 = vpack.c.b16 %v2612, %v2611
    %v2634 = vpack.c.b16 %v2614, %v2613
    %v2635 = vpack.c.b16 %v2616, %v2615
    %v2636 = vpack.c.b16 %v2618, %v2617
    %v2637 = vpack.c.b16 %v2620, %v2619
    %v2638 = vpack.c.b16 %v2622, %v2621
    %2655 = vmatprep.subr.bf16.mxu0 0
    %2656 = vmatpush1.bf16.msra.mxu0 %v2623
    %2657 = vmatprep.subr.bf16.mxu0 0
    %2658 = vmatpush1.bf16.msra.mxu0 %v2624
    %2659 = vmatprep.subr.bf16.mxu0 0
    %2660 = vmatpush1.bf16.msra.mxu0 %v2625
    %2661 = vmatprep.subr.bf16.mxu0 0
    %2662 = vmatpush1.bf16.msra.mxu0 %v2626
    %2663 = vmatprep.subr.bf16.mxu0 0
    %2664 = vmatpush1.bf16.msra.mxu0 %v2627
    %2665 = vmatprep.subr.bf16.mxu0 0
    %2666 = vmatpush1.bf16.msra.mxu0 %v2628
    %2667 = vmatprep.subr.bf16.mxu0 0
    %2668 = vmatpush1.bf16.msra.mxu0 %v2629
    %2669 = vmatprep.subr.bf16.mxu0 0
    %2670 = vmatpush1.bf16.msra.mxu0 %v2630
    %2671 = vmatprep.subr.bf16.mxu0 0
    %2672 = vmatpush1.bf16.msra.mxu0 %v2631
    %2673 = vmatprep.subr.bf16.mxu0 0
    %2674 = vmatpush1.bf16.msra.mxu0 %v2632
    %2675 = vmatprep.subr.bf16.mxu0 0
    %2676 = vmatpush1.bf16.msra.mxu0 %v2633
    %2677 = vmatprep.subr.bf16.mxu0 0
    %2678 = vmatpush1.bf16.msra.mxu0 %v2634
    %2679 = vmatprep.subr.bf16.mxu0 0
    %2680 = vmatpush1.bf16.msra.mxu0 %v2635
    %2681 = vmatprep.subr.bf16.mxu0 0
    %2682 = vmatpush1.bf16.msra.mxu0 %v2636
    %2683 = vmatprep.subr.bf16.mxu0 0
    %2684 = vmatpush1.bf16.msra.mxu0 %v2637
    %2685 = vmatprep.subr.bf16.mxu0 0
    %2686 = vmatpush1.bf16.msra.mxu0 %v2638
    %2687 = vmatprep.mubr.bf16.mxu0 %v2516
    %2688 = vmatmul.mubr.bf16.gmra.mrb[0].mxu0 %v2515
    %v2689 = vpop.f32.mrb[0].mxu0
    %v2690 = vadd.f32 %v2558, %v2689
    %v2691 = vpop.f32.mrb[0].mxu0
    %v2692 = vpop.f32.mrb[0].mxu0
    %v2693 = vadd.f32 %v2558, %v2692
    %v2694 = vpop.f32.mrb[0].mxu0
    %2695 = vmatprep.mubr.bf16.mxu0 %v2518
    %2696 = vmatmul.mubr.bf16.gmra.mrb[0].mxu0 %v2517
    %v2697 = vpop.f32.mrb[0].mxu0
    %v2698 = vadd.f32 %v2558, %v2697
    %v2699 = vpop.f32.mrb[0].mxu0
    %v2700 = vpop.f32.mrb[0].mxu0
    %v2701 = vadd.f32 %v2558, %v2700
    %v2702 = vpop.f32.mrb[0].mxu0
    %2703 = vmatprep.mubr.bf16.mxu0 %v2520
    %2704 = vmatmul.mubr.bf16.gmra.mrb[0].mxu0 %v2519
    %v2705 = vpop.f32.mrb[0].mxu0
    %v2706 = vadd.f32 %v2558, %v2705
    %v2707 = vpop.f32.mrb[0].mxu0
    %v2708 = vpop.f32.mrb[0].mxu0
    %v2709 = vadd.f32 %v2558, %v2708
    %v2710 = vpop.f32.mrb[0].mxu0
    %2711 = vmatprep.mubr.bf16.mxu0 %v2522
    %2712 = vmatmul.mubr.bf16.gmra.mrb[0].mxu0 %v2521
    %v2713 = vpop.f32.mrb[0].mxu0
    %v2714 = vadd.f32 %v2558, %v2713
    %v2715 = vpop.f32.mrb[0].mxu0
    %v2716 = vpop.f32.mrb[0].mxu0
    %v2717 = vadd.f32 %v2558, %v2716
    %v2718 = vpop.f32.mrb[0].mxu0
    %2719 = vdwg.mxu0
    %v2720 = vadd.f32 %v2690, %v2179
    %v2721 = vadd.f32 %v2693, %v2180
    %v2722 = vadd.f32 %v2698, %v2181
    %v2723 = vadd.f32 %v2701, %v2182
    %v2724 = vadd.f32 %v2706, %v2183
    %v2725 = vadd.f32 %v2709, %v2184
    %v2726 = vadd.f32 %v2714, %v2185
    %v2727 = vadd.f32 %v2717, %v2186
    %2728 = vst [vmem:[#allocation19] sm:$0xff] %v2720
    %2729 = vst [vmem:[#allocation19 + $0x8] sm:$0xff] %v2721
    %2730 = vst [vmem:[#allocation19 + $0x10] sm:$0xff] %v2722
    %2731 = vst [vmem:[#allocation19 + $0x18] sm:$0xff] %v2723
    %2732 = vst [vmem:[#allocation19 + $0x20] sm:$0xff] %v2724
    %2733 = vst [vmem:[#allocation19 + $0x28] sm:$0xff] %v2725
    %2734 = vst [vmem:[#allocation19 + $0x30] sm:$0xff] %v2726
    %2735 = vst [vmem:[#allocation19 + $0x38] sm:$0xff] %v2727
    // Predicated region
    $region98: #{tpu_custom_call.1} parent=1 // pred_check
      _
    $region99: #{tpu_custom_call.1} parent=1 // pred_check_branch
      %2737 = sbr.rel (0) target = $region101
    $region100: #{tpu_custom_call.1} parent=1 // pred_region
      %s2739 = ssub.s32 1024, 1024
      %2740 = vsyncadd [#allocation4], %s2739
      %s2741 = sshll.u32 [#allocation19], 4
      %s2742 = int_to_ptr.vmem [resolvable:$true] %s2741
      %2747 = dma.vmem_to_hbm [thread:$0]  %s2742, 1024, %s14, [#allocation4], 128, 128, 8
    $region101: #{tpu_custom_call.1} parent=1 // pred_fallthru
      _
    // Predicated region
    $region102: #{tpu_custom_call.1} parent=1 // pred_check
      _
    $region103: #{tpu_custom_call.1} parent=1 // pred_check_branch
      %2749 = sbr.rel (0) target = $region105
    $region104: #{tpu_custom_call.1} parent=1 // pred_region
      %2750 = dma.done [#allocation4], 1024
    $region105: #{tpu_custom_call.1} parent=1 // pred_fallthru
      _
    %2751 = vsyncpa [#allocation3], 1
    %2752 = vsyncpa [#allocation6], 1
    %2753 = vsyncpa [#allocation9], 1
    %2754 = vsyncpa [#allocation12], 1
    %2755 = vsyncpa [#allocation15], 1
    %2756 = vsyncpa [#allocation18], 1
    %2757 = vsyncpa [#allocation4], 1

</llo_original>
